<compile_context>
chip_gen: v7x
topology: tpu7x:2x2x1
jax: 0.10.0
libtpu: 0.0.40
codegen_flags: <defaults>
</compile_context>

<pallas_src>
import functools

import jax
import jax.numpy as jnp
from jax.experimental import pallas as pl
from jax.experimental.pallas import tpu as pltpu


def _sigmoid(z):
    # Exact f32 sigmoid. exp() runs on the EUP slot; the divide stays exact
    # (the VPU is nowhere near the bottleneck of this mem-bound kernel).
    return 1.0 / (1.0 + jnp.exp(-z))


def sae_kernel(x_ref,
               w1_ref, b1_ref,
               w2_ref, b2_ref,
               w3_ref, b3_ref,
               w4_ref, b4_ref,
               out_ref):
    # I/O may be bf16; all compute (matmul accumulation + sigmoids) is f32.
    x = x_ref[...].astype(jnp.float32)

    h1 = _sigmoid(jnp.dot(x, w1_ref[...],
                          preferred_element_type=jnp.float32) + b1_ref[...])
    h2 = _sigmoid(jnp.dot(h1, w2_ref[...],
                          preferred_element_type=jnp.float32) + b2_ref[...])
    h3 = _sigmoid(jnp.dot(h2, w3_ref[...],
                          preferred_element_type=jnp.float32) + b3_ref[...])
    y = jnp.dot(h3, w4_ref[...],
                preferred_element_type=jnp.float32) + b4_ref[...]

    out_ref[...] = y.astype(out_ref.dtype)


def _round_up(n, m):
    return ((n + m - 1) // m) * m


def prepare_params(params, pad_lanes_to=128):
    """One-time glue, hoisted out of the per-call hot path.

    Transposes PyTorch weights (out, in) -> (in, out) so the kernel is a plain
    x @ W on the MXU, reshapes biases to (1, out), and zero-pads the hidden
    dims up to a multiple of `pad_lanes_to` lanes. Padded weight rows are zero,
    so the (sigmoid(0)=0.5) values in padded activation lanes contribute
    nothing downstream -> results are unchanged.
    """
    w = [jnp.asarray(params[f"w{i}"], jnp.float32).T for i in range(1, 5)]
    b = [jnp.asarray(params[f"b{i}"], jnp.float32).reshape(1, -1)
         for i in range(1, 5)]

    if pad_lanes_to:
        hn = w[0].shape[1]
        half = w[1].shape[1]
        hn_p = _round_up(hn, pad_lanes_to)
        half_p = _round_up(half, pad_lanes_to)

        w[0] = jnp.pad(w[0], ((0, 0), (0, hn_p - hn)))            # (F, hn_p)
        b[0] = jnp.pad(b[0], ((0, 0), (0, hn_p - hn)))
        w[1] = jnp.pad(w[1], ((0, hn_p - hn), (0, half_p - half)))  # (hn_p, half_p)
        b[1] = jnp.pad(b[1], ((0, 0), (0, half_p - half)))
        w[2] = jnp.pad(w[2], ((0, half_p - half), (0, hn_p - hn)))  # (half_p, hn_p)
        b[2] = jnp.pad(b[2], ((0, 0), (0, hn_p - hn)))
        w[3] = jnp.pad(w[3], ((0, hn_p - hn), (0, 0)))             # (hn_p, F)
        # b[3] stays (1, F).

    prepped = {}
    for i in range(4):
        prepped[f"w{i + 1}t"] = w[i]
        prepped[f"b{i + 1}"] = b[i]
    return prepped


def _choose_tile_b(B, tile_b):
    """Sublane-aligned batch tile.

    Aims for >= 4 grid steps (>= 2 per v7x TensorCore so per-core DMAs overlap
    compute) without dropping below 128 rows; for large B keeps the full
    tile_b (default 1024) to amortize the ~0.35us per-grid-step overhead.
    """
    tb = max(8, _round_up(min(tile_b, B), 8))
    while tb > 128 and -(-B // tb) < 4:
        tb = max(128, _round_up(tb // 2, 8))
    return tb


@functools.partial(jax.jit, static_argnames=("tile_b",))
def sae_forward(x, prepped, *, tile_b=1024):
    """x: (B, F) float32 or bfloat16. prepped: output of prepare_params()."""
    B, F = x.shape
    w1t, w2t, w3t, w4t = (prepped[f"w{i}t"] for i in range(1, 5))
    b1, b2, b3, b4 = (prepped[f"b{i}"] for i in range(1, 5))
    hn_p = w1t.shape[1]
    half_p = w2t.shape[1]

    tb = _choose_tile_b(B, tile_b)
    n_tiles = pl.cdiv(B, tb)
    # No jnp.pad of x for ragged B: Pallas handles the partial last block
    # (never add a cross-batch reduction inside the kernel in this mode).

    # F is the full last dim (lane-dense unmasked stores when F % 128 == 0).
    io_spec = pl.BlockSpec((tb, F), lambda i: (i, 0))

    def resident(shape):
        # Whole array, same block every grid step -> VMEM-resident. The block
        # never changes, so a single buffer suffices (no double-buffer waste).
        return pl.BlockSpec(shape, lambda i: (0, 0),
                            pipeline_mode=pl.Buffered(1))

    # Advisory cost estimate (helps XLA schedule around the custom call).
    flops = 2 * B * (F * hn_p + hn_p * half_p + half_p * hn_p + hn_p * F)
    transcendentals = B * (2 * hn_p + half_p)      # one exp per sigmoid output
    param_bytes = 4 * sum(int(a.size) for a in
                          (w1t, w2t, w3t, w4t, b1, b2, b3, b4))
    io_item = jnp.dtype(x.dtype).itemsize
    bytes_accessed = 2 * B * F * io_item + param_bytes

    # VMEM budget: double-buffered in/out tiles + single-buffered params +
    # headroom, capped at 48 MiB (safe under v7x's 64 MiB physical VMEM/TC).
    tile_bytes = io_item * tb * F
    vmem_limit = int(min(48 * 1024 * 1024,
                         max(16 * 1024 * 1024,
                             4 * tile_bytes + param_bytes + (4 << 20))))

    return pl.pallas_call(
        sae_kernel,
        out_shape=jax.ShapeDtypeStruct((B, F), x.dtype),
        grid=(n_tiles,),
        in_specs=[io_spec,
                  resident(w1t.shape), resident(b1.shape),
                  resident(w2t.shape), resident(b2.shape),
                  resident(w3t.shape), resident(b3.shape),
                  resident(w4t.shape), resident(b4.shape)],
        out_specs=io_spec,
        compiler_params=pltpu.CompilerParams(
            dimension_semantics=("parallel",),   # batch-parallel: v7x megacore
            vmem_limit_bytes=vmem_limit,
        ),
        cost_estimate=pl.CostEstimate(
            flops=flops,
            transcendentals=transcendentals,
            bytes_accessed=bytes_accessed,
        ),
    )(x, w1t, b1, w2t, b2, w3t, b3, w4t, b4)


def init_params(key, number_of_features, hn_neurons):
    """Deterministic PyTorch-like nn.Linear init: U(-1/sqrt(fan_in), 1/sqrt(fan_in))."""
    half = int(hn_neurons / 2)
    dims = [
        (hn_neurons, number_of_features),   # fc1
        (half, hn_neurons),                 # fc2
        (hn_neurons, half),                 # fc3
        (number_of_features, hn_neurons),   # fc4
    ]
    params = {}
    for i, (out_d, in_d) in enumerate(dims, start=1):
        key, kw, kb = jax.random.split(key, 3)
        bound = 1.0 / jnp.sqrt(jnp.float32(in_d))
        params[f"w{i}"] = jax.random.uniform(
            kw, (out_d, in_d), jnp.float32, minval=-bound, maxval=bound)
        params[f"b{i}"] = jax.random.uniform(
            kb, (out_d,), jnp.float32, minval=-bound, maxval=bound)
    return params


def sae_reference(x, params):
    """Pure-JAX reference of the PyTorch forward (same sigmoid formulation)."""
    h = _sigmoid(x @ params["w1"].T + params["b1"])
    h = _sigmoid(h @ params["w2"].T + params["b2"])
    h = _sigmoid(h @ params["w3"].T + params["b3"])
    return h @ params["w4"].T + params["b4"]


if __name__ == "__main__":
    key = jax.random.PRNGKey(0)
    key, kx = jax.random.split(key)

    # TPU-friendly shapes: lane-dense features (multiple of 128), batch large
    # enough to exercise a multi-step grid (4 steps at the chosen tile).
    batch = 1024
    number_of_features = 128
    hn_neurons = 64

    x = jax.random.normal(kx, (batch, number_of_features), jnp.float32)
    params = init_params(key, number_of_features, hn_neurons)
    prepped = prepare_params(params)          # one-time transpose/pad hoist

    ref = sae_reference(x, params)

    # 1) f32, aligned batch.
    out = jax.block_until_ready(sae_forward(x, prepped))
    assert out.shape == (batch, number_of_features)
    assert jnp.allclose(out, ref, atol=1e-4, rtol=1e-4), float(
        jnp.max(jnp.abs(out - ref)))

    # 2) Ragged batch (not a multiple of the tile): no host-side pad copy;
    #    Pallas handles the partial last block itself.
    x_ragged = x[:1000]
    out_r = jax.block_until_ready(sae_forward(x_ragged, prepped))
    assert out_r.shape == (1000, number_of_features)
    assert jnp.allclose(out_r, ref[:1000], atol=1e-4, rtol=1e-4), float(
        jnp.max(jnp.abs(out_r - ref[:1000])))

    # 3) bf16 I/O (halves the dominant HBM traffic); compute stays in f32.
    x_bf16 = x.astype(jnp.bfloat16)
    out_b = jax.block_until_ready(sae_forward(x_bf16, prepped))
    ref_b = sae_reference(x_bf16.astype(jnp.float32), params)
    assert out_b.dtype == jnp.bfloat16
    assert jnp.allclose(out_b.astype(jnp.float32), ref_b,
                        atol=3e-2, rtol=3e-2), float(
        jnp.max(jnp.abs(out_b.astype(jnp.float32) - ref_b)))

    print("KERNEL_OK")
</pallas_src>

<mosaic_0001>
module attributes {stable_mosaic.version = 11 : i64} {
  func.func @sae_kernel(%arg0: i32, %arg1: memref<256x128xf32, #tpu.memory_space<vmem>>, %arg2: memref<128x128xf32, #tpu.memory_space<vmem>>, %arg3: memref<1x128xf32, #tpu.memory_space<vmem>>, %arg4: memref<128x128xf32, #tpu.memory_space<vmem>>, %arg5: memref<1x128xf32, #tpu.memory_space<vmem>>, %arg6: memref<128x128xf32, #tpu.memory_space<vmem>>, %arg7: memref<1x128xf32, #tpu.memory_space<vmem>>, %arg8: memref<128x128xf32, #tpu.memory_space<vmem>>, %arg9: memref<1x128xf32, #tpu.memory_space<vmem>>, %arg10: memref<256x128xf32, #tpu.memory_space<vmem>>) attributes {dimension_semantics = [#tpu.dimension_semantics<parallel>], iteration_bounds = array<i64: 4>, scalar_prefetch = 0 : i64, scratch_operands = 0 : i64, tpu.core_type = #tpu.core_type<tc>, window_params = [{transform_indices = @transform_0, window_bounds = array<i64: 256, 128>}, {pipeline_mode = #tpu.pipeline_mode<synchronous>, transform_indices = @transform_1, window_bounds = array<i64: 128, 128>}, {pipeline_mode = #tpu.pipeline_mode<synchronous>, transform_indices = @transform_2, window_bounds = array<i64: 1, 128>}, {pipeline_mode = #tpu.pipeline_mode<synchronous>, transform_indices = @transform_3, window_bounds = array<i64: 128, 128>}, {pipeline_mode = #tpu.pipeline_mode<synchronous>, transform_indices = @transform_4, window_bounds = array<i64: 1, 128>}, {pipeline_mode = #tpu.pipeline_mode<synchronous>, transform_indices = @transform_5, window_bounds = array<i64: 128, 128>}, {pipeline_mode = #tpu.pipeline_mode<synchronous>, transform_indices = @transform_6, window_bounds = array<i64: 1, 128>}, {pipeline_mode = #tpu.pipeline_mode<synchronous>, transform_indices = @transform_7, window_bounds = array<i64: 128, 128>}, {pipeline_mode = #tpu.pipeline_mode<synchronous>, transform_indices = @transform_8, window_bounds = array<i64: 1, 128>}, {transform_indices = @transform_9, window_bounds = array<i64: 256, 128>}]} {
    %c0 = arith.constant 0 : index
    %c0_0 = arith.constant 0 : index
    %0 = vector.load %arg1[%c0, %c0_0] : memref<256x128xf32, #tpu.memory_space<vmem>>, vector<256x128xf32>
    %c0_1 = arith.constant 0 : index
    %c0_2 = arith.constant 0 : index
    %1 = vector.load %arg2[%c0_1, %c0_2] : memref<128x128xf32, #tpu.memory_space<vmem>>, vector<128x128xf32>
    %cst = arith.constant dense<0.000000e+00> : vector<256x128xf32>
    %2 = tpu.matmul %0, %1, %cst {dimension_numbers = #tpu.dot_dimension_numbers<[1], [0], [0], [1], [0, 0, 1, 1], [], []>} : vector<256x128xf32>, vector<128x128xf32>, vector<256x128xf32> -> vector<256x128xf32>
    %c0_3 = arith.constant 0 : index
    %c0_4 = arith.constant 0 : index
    %3 = vector.load %arg3[%c0_3, %c0_4] : memref<1x128xf32, #tpu.memory_space<vmem>>, vector<1x128xf32>
    %4 = vector.broadcast %3 : vector<1x128xf32> to vector<256x128xf32>
    %5 = arith.addf %2, %4 : vector<256x128xf32>
    %cst_5 = arith.constant 0.000000e+00 : f32
    %6 = vector.broadcast %cst_5 : f32 to vector<256x128xf32>
    %7 = arith.subf %6, %5 : vector<256x128xf32>
    %8 = math.exp %7 : vector<256x128xf32>
    %cst_6 = arith.constant 1.000000e+00 : f32
    %9 = vector.broadcast %cst_6 : f32 to vector<256x128xf32>
    %10 = arith.addf %9, %8 : vector<256x128xf32>
    %cst_7 = arith.constant 1.000000e+00 : f32
    %11 = vector.broadcast %cst_7 : f32 to vector<256x128xf32>
    %12 = arith.divf %11, %10 : vector<256x128xf32>
    %c0_8 = arith.constant 0 : index
    %c0_9 = arith.constant 0 : index
    %13 = vector.load %arg4[%c0_8, %c0_9] : memref<128x128xf32, #tpu.memory_space<vmem>>, vector<128x128xf32>
    %cst_10 = arith.constant dense<0.000000e+00> : vector<256x128xf32>
    %14 = tpu.matmul %12, %13, %cst_10 {dimension_numbers = #tpu.dot_dimension_numbers<[1], [0], [0], [1], [0, 0, 1, 1], [], []>} : vector<256x128xf32>, vector<128x128xf32>, vector<256x128xf32> -> vector<256x128xf32>
    %c0_11 = arith.constant 0 : index
    %c0_12 = arith.constant 0 : index
    %15 = vector.load %arg5[%c0_11, %c0_12] : memref<1x128xf32, #tpu.memory_space<vmem>>, vector<1x128xf32>
    %16 = vector.broadcast %15 : vector<1x128xf32> to vector<256x128xf32>
    %17 = arith.addf %14, %16 : vector<256x128xf32>
    %cst_13 = arith.constant 0.000000e+00 : f32
    %18 = vector.broadcast %cst_13 : f32 to vector<256x128xf32>
    %19 = arith.subf %18, %17 : vector<256x128xf32>
    %20 = math.exp %19 : vector<256x128xf32>
    %cst_14 = arith.constant 1.000000e+00 : f32
    %21 = vector.broadcast %cst_14 : f32 to vector<256x128xf32>
    %22 = arith.addf %21, %20 : vector<256x128xf32>
    %cst_15 = arith.constant 1.000000e+00 : f32
    %23 = vector.broadcast %cst_15 : f32 to vector<256x128xf32>
    %24 = arith.divf %23, %22 : vector<256x128xf32>
    %c0_16 = arith.constant 0 : index
    %c0_17 = arith.constant 0 : index
    %25 = vector.load %arg6[%c0_16, %c0_17] : memref<128x128xf32, #tpu.memory_space<vmem>>, vector<128x128xf32>
    %cst_18 = arith.constant dense<0.000000e+00> : vector<256x128xf32>
    %26 = tpu.matmul %24, %25, %cst_18 {dimension_numbers = #tpu.dot_dimension_numbers<[1], [0], [0], [1], [0, 0, 1, 1], [], []>} : vector<256x128xf32>, vector<128x128xf32>, vector<256x128xf32> -> vector<256x128xf32>
    %c0_19 = arith.constant 0 : index
    %c0_20 = arith.constant 0 : index
    %27 = vector.load %arg7[%c0_19, %c0_20] : memref<1x128xf32, #tpu.memory_space<vmem>>, vector<1x128xf32>
    %28 = vector.broadcast %27 : vector<1x128xf32> to vector<256x128xf32>
    %29 = arith.addf %26, %28 : vector<256x128xf32>
    %cst_21 = arith.constant 0.000000e+00 : f32
    %30 = vector.broadcast %cst_21 : f32 to vector<256x128xf32>
    %31 = arith.subf %30, %29 : vector<256x128xf32>
    %32 = math.exp %31 : vector<256x128xf32>
    %cst_22 = arith.constant 1.000000e+00 : f32
    %33 = vector.broadcast %cst_22 : f32 to vector<256x128xf32>
    %34 = arith.addf %33, %32 : vector<256x128xf32>
    %cst_23 = arith.constant 1.000000e+00 : f32
    %35 = vector.broadcast %cst_23 : f32 to vector<256x128xf32>
    %36 = arith.divf %35, %34 : vector<256x128xf32>
    %c0_24 = arith.constant 0 : index
    %c0_25 = arith.constant 0 : index
    %37 = vector.load %arg8[%c0_24, %c0_25] : memref<128x128xf32, #tpu.memory_space<vmem>>, vector<128x128xf32>
    %cst_26 = arith.constant dense<0.000000e+00> : vector<256x128xf32>
    %38 = tpu.matmul %36, %37, %cst_26 {dimension_numbers = #tpu.dot_dimension_numbers<[1], [0], [0], [1], [0, 0, 1, 1], [], []>} : vector<256x128xf32>, vector<128x128xf32>, vector<256x128xf32> -> vector<256x128xf32>
    %c0_27 = arith.constant 0 : index
    %c0_28 = arith.constant 0 : index
    %39 = vector.load %arg9[%c0_27, %c0_28] : memref<1x128xf32, #tpu.memory_space<vmem>>, vector<1x128xf32>
    %40 = vector.broadcast %39 : vector<1x128xf32> to vector<256x128xf32>
    %41 = arith.addf %38, %40 : vector<256x128xf32>
    %c0_29 = arith.constant 0 : index
    %c0_30 = arith.constant 0 : index
    %42 = vector.load %arg10[%c0_29, %c0_30] : memref<256x128xf32, #tpu.memory_space<vmem>>, vector<256x128xf32>
    tpu.vector_store %arg10[%c0_29, %c0_30], %41 {strides = array<i32>} : memref<256x128xf32, #tpu.memory_space<vmem>>, vector<256x128xf32>,
    return
  }
  func.func @transform_0(%arg0: i32) -> (i32, i32) {
    %c0_i32 = arith.constant 0 : i32
    %c0_i32_0 = arith.constant 0 : i32
    return %arg0, %c0_i32 : i32, i32
  }
  func.func @transform_1(%arg0: i32) -> (i32, i32) {
    %c0_i32 = arith.constant 0 : i32
    %c0_i32_0 = arith.constant 0 : i32
    %c0_i32_1 = arith.constant 0 : i32
    return %c0_i32, %c0_i32_0 : i32, i32
  }
  func.func @transform_2(%arg0: i32) -> (i32, i32) {
    %c0_i32 = arith.constant 0 : i32
    %c0_i32_0 = arith.constant 0 : i32
    %c0_i32_1 = arith.constant 0 : i32
    return %c0_i32, %c0_i32_0 : i32, i32
  }
  func.func @transform_3(%arg0: i32) -> (i32, i32) {
    %c0_i32 = arith.constant 0 : i32
    %c0_i32_0 = arith.constant 0 : i32
    %c0_i32_1 = arith.constant 0 : i32
    return %c0_i32, %c0_i32_0 : i32, i32
  }
  func.func @transform_4(%arg0: i32) -> (i32, i32) {
    %c0_i32 = arith.constant 0 : i32
    %c0_i32_0 = arith.constant 0 : i32
    %c0_i32_1 = arith.constant 0 : i32
    return %c0_i32, %c0_i32_0 : i32, i32
  }
  func.func @transform_5(%arg0: i32) -> (i32, i32) {
    %c0_i32 = arith.constant 0 : i32
    %c0_i32_0 = arith.constant 0 : i32
    %c0_i32_1 = arith.constant 0 : i32
    return %c0_i32, %c0_i32_0 : i32, i32
  }
  func.func @transform_6(%arg0: i32) -> (i32, i32) {
    %c0_i32 = arith.constant 0 : i32
    %c0_i32_0 = arith.constant 0 : i32
    %c0_i32_1 = arith.constant 0 : i32
    return %c0_i32, %c0_i32_0 : i32, i32
  }
  func.func @transform_7(%arg0: i32) -> (i32, i32) {
    %c0_i32 = arith.constant 0 : i32
    %c0_i32_0 = arith.constant 0 : i32
    %c0_i32_1 = arith.constant 0 : i32
    return %c0_i32, %c0_i32_0 : i32, i32
  }
  func.func @transform_8(%arg0: i32) -> (i32, i32) {
    %c0_i32 = arith.constant 0 : i32
    %c0_i32_0 = arith.constant 0 : i32
    %c0_i32_1 = arith.constant 0 : i32
    return %c0_i32, %c0_i32_0 : i32, i32
  }
  func.func @transform_9(%arg0: i32) -> (i32, i32) {
    %c0_i32 = arith.constant 0 : i32
    %c0_i32_0 = arith.constant 0 : i32
    return %arg0, %c0_i32 : i32, i32
  }
}

</mosaic_0001>

<llo_original>
// kernel: sae_forward.1
$region0: #{sae_forward.1}
  #allocation0 [shape = 'u32[]', space=smem, size = 0x4, offset = 0x4, fixed_abs, tag = 'smem constant byte address 0x4 - core index']
  #allocation1 [shape = 'u32[144,128]{1,0:T(1,128)}', space=vmem, size = 0x12000, scoped, tag = 'internal scratch']
  %s0 = inlined_call_operand.hbm [shape: f32[1024,128], index: 0, kind: input, shape index: {}]
  %s1 = inlined_call_operand.hbm [shape: f32[128,128], index: 1, kind: input, shape index: {}]
  %s2 = inlined_call_operand.vmem [shape: f32[1,128], index: 2, kind: input, shape index: {}]
  %s3 = inlined_call_operand.hbm [shape: f32[128,128], index: 3, kind: input, shape index: {}]
  %s4 = inlined_call_operand.vmem [shape: f32[1,128], index: 4, kind: input, shape index: {}]
  %s5 = inlined_call_operand.hbm [shape: f32[128,128], index: 5, kind: input, shape index: {}]
  %s6 = inlined_call_operand.vmem [shape: f32[1,128], index: 6, kind: input, shape index: {}]
  %s7 = inlined_call_operand.hbm [shape: f32[128,128], index: 7, kind: input, shape index: {}]
  %s8 = inlined_call_operand.vmem [shape: f32[1,128], index: 8, kind: input, shape index: {}]
  %s9 = inlined_call_operand.hbm [shape: f32[1024,128], index: 9, kind: output, shape index: {}]
  %s10 = sld [smem:[#allocation0]]
  $region89: #{sae_forward.1} parent=0
    _
  %s12 = ssub.s32 1, %s10
  %s13 = scalar_select 0, %s12, %s10
  $region1: #{sae_forward.1} parent=0
    #allocation2 [shape = 'u8[262144]{0}', space=vmem, size = 0x40000, scoped, tag = 'input window, operand 0']
    #allocation3 [shape = 's32[2]{0}', space=sflag, size = 0x8, scoped, tag = 'scoped memory for sae_forward.1']
    #allocation4 [shape = 's32[2]{0}', space=sflag, size = 0x8, scoped, tag = 'scoped memory for sae_forward.1']
    #allocation5 [shape = 'u8[65536]{0}', space=vmem, size = 0x10000, scoped, tag = 'input window, operand 1, single buffered']
    #allocation6 [shape = 's32[1]{0}', space=sflag, size = 0x4, scoped, tag = 'scoped memory for sae_forward.1']
    #allocation7 [shape = 'u8[65536]{0}', space=vmem, size = 0x10000, scoped, tag = 'input window, operand 3, single buffered']
    #allocation8 [shape = 'u8[65536]{0}', space=vmem, size = 0x10000, scoped, tag = 'input window, operand 5, single buffered']
    #allocation9 [shape = 's32[1]{0}', space=sflag, size = 0x4, scoped, tag = 'scoped memory for sae_forward.1']
    #allocation10 [shape = 'u8[65536]{0}', space=vmem, size = 0x10000, scoped, tag = 'input window, operand 7, single buffered']
    #allocation11 [shape = 'u8[262144]{0}', space=vmem, size = 0x40000, scoped, tag = 'output window, operand 0']
    %14 = vsyncpa [#allocation3], 0
    %s15 = scalar_lea.sflag [#allocation3], 1
    %16 = vsyncpa %s15, 0
    %17 = vsyncpa [#allocation6], 0
    %18 = vsyncpa [#allocation9], 0
    %19 = vsyncpa [#allocation4], 0
    %s20 = scalar_lea.sflag [#allocation4], 1
    %21 = vsyncpa %s20, 0
    loop: start=0, step=1, limit=6
    $region2: #{sae_forward.1} parent=1 // loop_pre_header
      _
    $region3: #{sae_forward.1} parent=1 // loop_header
      %s23 = sphi 0, %s27
      %p24 = scmp.ge.s32.totalorder %s23, 6
      %s33 = sphi 0, %s35
      %s36 = sphi 0, %s33
      %s37 = sphi 0, %s36
      %s53 = sphi 0, %s37
      %s57 = sphi 0, %s57
      %s59 = sphi 0, %s57
      %s60 = sphi 0, %s59
      %s74 = sphi 0, %s60
      %s78 = sphi 0, %s78
      %s80 = sphi 0, %s78
      %s81 = sphi 0, %s80
      %s95 = sphi 0, %s81
      %s99 = sphi 0, %s99
      %s101 = sphi 0, %s99
      %s102 = sphi 0, %s101
      %s116 = sphi 0, %s102
      %s120 = sphi 0, %s120
      %s122 = sphi 0, %s120
      %s123 = sphi 0, %s122
      %s137 = sphi 0, %s123
      %s141 = sphi 0, %s141
      %s143 = sphi 0, %s141
      %s144 = sphi 0, %s143
      %s158 = sphi 0, %s144
      %s162 = sphi 0, %s162
      %s164 = sphi 0, %s162
      %s165 = sphi 0, %s164
      %s179 = sphi 0, %s165
      %s183 = sphi 0, %s183
      %s185 = sphi 0, %s183
      %s186 = sphi 0, %s185
      %s200 = sphi 0, %s186
      %s204 = sphi 0, %s204
      %s206 = sphi 0, %s204
      %s207 = sphi 0, %s206
      %s221 = sphi 0, %s207
      %s227 = sphi 0, %s229
      %s230 = sphi 0, %s227
      %s231 = sphi 0, %s230
      %s247 = sphi 0, %s231
    $region4: #{sae_forward.1} parent=1 // loop_header_branch
      %26 = sbr.rel (%p24) target = $region8
    $region5: #{sae_forward.1} parent=1 // loop_body
      %s28 = ssub.s32 %s23, 1
      %s29 = ssub.s32 %s23, 2
      %s30 = sadd.s32 %s23, 1
      %s31 = ssub.s32 %s23, %s30
      %p32 = scmp.eq.s32.totalorder %s31, 0
      %s34 = sadd.s32 %s33, 1
      %s35 = scalar_select %p32, %s33, %s34
      %p38 = pneg %p32
      %p39 = scmp.eq.s32.totalorder %s23, 3
      %p40 = por %p38, %p39
      %p41 = scmp.ne.s32.totalorder %s33, %s36
      %p42 = scmp.eq.s32.totalorder %s23, 0
      %p43 = por %p41, %p42
      %p44 = scmp.ne.s32.totalorder %s33, %s36
      %p45 = scmp.eq.s32.totalorder %s28, 3
      %p46 = por %p44, %p45
      %p47 = scmp.ne.s32.totalorder %s36, %s37
      %p48 = scmp.eq.s32.totalorder %s28, 0
      %p49 = por %p47, %p48
      %p50 = scmp.ne.s32.totalorder %s36, %s37
      %p51 = scmp.eq.s32.totalorder %s29, 3
      %p52 = por %p50, %p51
      %p54 = scmp.ne.s32.totalorder %s37, %s53
      %p55 = scmp.eq.s32.totalorder %s29, 0
      %p56 = por %p54, %p55
      %s58 = sadd.s32 %s57, 1
      %p61 = scmp.eq.s32.totalorder %s23, 3
      %p62 = scmp.ne.s32.totalorder %s57, %s59
      %p63 = scmp.eq.s32.totalorder %s23, 0
      %p64 = por %p62, %p63
      %p65 = scmp.ne.s32.totalorder %s57, %s59
      %p66 = scmp.eq.s32.totalorder %s28, 3
      %p67 = por %p65, %p66
      %p68 = scmp.ne.s32.totalorder %s59, %s60
      %p69 = scmp.eq.s32.totalorder %s28, 0
      %p70 = por %p68, %p69
      %p71 = scmp.ne.s32.totalorder %s59, %s60
      %p72 = scmp.eq.s32.totalorder %s29, 3
      %p73 = por %p71, %p72
      %p75 = scmp.ne.s32.totalorder %s60, %s74
      %p76 = scmp.eq.s32.totalorder %s29, 0
      %p77 = por %p75, %p76
      %s79 = sadd.s32 %s78, 1
      %p82 = scmp.eq.s32.totalorder %s23, 3
      %p83 = scmp.ne.s32.totalorder %s78, %s80
      %p84 = scmp.eq.s32.totalorder %s23, 0
      %p85 = por %p83, %p84
      %p86 = scmp.ne.s32.totalorder %s78, %s80
      %p87 = scmp.eq.s32.totalorder %s28, 3
      %p88 = por %p86, %p87
      %p89 = scmp.ne.s32.totalorder %s80, %s81
      %p90 = scmp.eq.s32.totalorder %s28, 0
      %p91 = por %p89, %p90
      %p92 = scmp.ne.s32.totalorder %s80, %s81
      %p93 = scmp.eq.s32.totalorder %s29, 3
      %p94 = por %p92, %p93
      %p96 = scmp.ne.s32.totalorder %s81, %s95
      %p97 = scmp.eq.s32.totalorder %s29, 0
      %p98 = por %p96, %p97
      %s100 = sadd.s32 %s99, 1
      %p103 = scmp.eq.s32.totalorder %s23, 3
      %p104 = scmp.ne.s32.totalorder %s99, %s101
      %p105 = scmp.eq.s32.totalorder %s23, 0
      %p106 = por %p104, %p105
      %p107 = scmp.ne.s32.totalorder %s99, %s101
      %p108 = scmp.eq.s32.totalorder %s28, 3
      %p109 = por %p107, %p108
      %p110 = scmp.ne.s32.totalorder %s101, %s102
      %p111 = scmp.eq.s32.totalorder %s28, 0
      %p112 = por %p110, %p111
      %p113 = scmp.ne.s32.totalorder %s101, %s102
      %p114 = scmp.eq.s32.totalorder %s29, 3
      %p115 = por %p113, %p114
      %p117 = scmp.ne.s32.totalorder %s102, %s116
      %p118 = scmp.eq.s32.totalorder %s29, 0
      %p119 = por %p117, %p118
      %s121 = sadd.s32 %s120, 1
      %p124 = scmp.eq.s32.totalorder %s23, 3
      %p125 = scmp.ne.s32.totalorder %s120, %s122
      %p126 = scmp.eq.s32.totalorder %s23, 0
      %p127 = por %p125, %p126
      %p128 = scmp.ne.s32.totalorder %s120, %s122
      %p129 = scmp.eq.s32.totalorder %s28, 3
      %p130 = por %p128, %p129
      %p131 = scmp.ne.s32.totalorder %s122, %s123
      %p132 = scmp.eq.s32.totalorder %s28, 0
      %p133 = por %p131, %p132
      %p134 = scmp.ne.s32.totalorder %s122, %s123
      %p135 = scmp.eq.s32.totalorder %s29, 3
      %p136 = por %p134, %p135
      %p138 = scmp.ne.s32.totalorder %s123, %s137
      %p139 = scmp.eq.s32.totalorder %s29, 0
      %p140 = por %p138, %p139
      %s142 = sadd.s32 %s141, 1
      %p145 = scmp.eq.s32.totalorder %s23, 3
      %p146 = scmp.ne.s32.totalorder %s141, %s143
      %p147 = scmp.eq.s32.totalorder %s23, 0
      %p148 = por %p146, %p147
      %p149 = scmp.ne.s32.totalorder %s141, %s143
      %p150 = scmp.eq.s32.totalorder %s28, 3
      %p151 = por %p149, %p150
      %p152 = scmp.ne.s32.totalorder %s143, %s144
      %p153 = scmp.eq.s32.totalorder %s28, 0
      %p154 = por %p152, %p153
      %p155 = scmp.ne.s32.totalorder %s143, %s144
      %p156 = scmp.eq.s32.totalorder %s29, 3
      %p157 = por %p155, %p156
      %p159 = scmp.ne.s32.totalorder %s144, %s158
      %p160 = scmp.eq.s32.totalorder %s29, 0
      %p161 = por %p159, %p160
      %s163 = sadd.s32 %s162, 1
      %p166 = scmp.eq.s32.totalorder %s23, 3
      %p167 = scmp.ne.s32.totalorder %s162, %s164
      %p168 = scmp.eq.s32.totalorder %s23, 0
      %p169 = por %p167, %p168
      %p170 = scmp.ne.s32.totalorder %s162, %s164
      %p171 = scmp.eq.s32.totalorder %s28, 3
      %p172 = por %p170, %p171
      %p173 = scmp.ne.s32.totalorder %s164, %s165
      %p174 = scmp.eq.s32.totalorder %s28, 0
      %p175 = por %p173, %p174
      %p176 = scmp.ne.s32.totalorder %s164, %s165
      %p177 = scmp.eq.s32.totalorder %s29, 3
      %p178 = por %p176, %p177
      %p180 = scmp.ne.s32.totalorder %s165, %s179
      %p181 = scmp.eq.s32.totalorder %s29, 0
      %p182 = por %p180, %p181
      %s184 = sadd.s32 %s183, 1
      %p187 = scmp.eq.s32.totalorder %s23, 3
      %p188 = scmp.ne.s32.totalorder %s183, %s185
      %p189 = scmp.eq.s32.totalorder %s23, 0
      %p190 = por %p188, %p189
      %p191 = scmp.ne.s32.totalorder %s183, %s185
      %p192 = scmp.eq.s32.totalorder %s28, 3
      %p193 = por %p191, %p192
      %p194 = scmp.ne.s32.totalorder %s185, %s186
      %p195 = scmp.eq.s32.totalorder %s28, 0
      %p196 = por %p194, %p195
      %p197 = scmp.ne.s32.totalorder %s185, %s186
      %p198 = scmp.eq.s32.totalorder %s29, 3
      %p199 = por %p197, %p198
      %p201 = scmp.ne.s32.totalorder %s186, %s200
      %p202 = scmp.eq.s32.totalorder %s29, 0
      %p203 = por %p201, %p202
      %s205 = sadd.s32 %s204, 1
      %p208 = scmp.eq.s32.totalorder %s23, 3
      %p209 = scmp.ne.s32.totalorder %s204, %s206
      %p210 = scmp.eq.s32.totalorder %s23, 0
      %p211 = por %p209, %p210
      %p212 = scmp.ne.s32.totalorder %s204, %s206
      %p213 = scmp.eq.s32.totalorder %s28, 3
      %p214 = por %p212, %p213
      %p215 = scmp.ne.s32.totalorder %s206, %s207
      %p216 = scmp.eq.s32.totalorder %s28, 0
      %p217 = por %p215, %p216
      %p218 = scmp.ne.s32.totalorder %s206, %s207
      %p219 = scmp.eq.s32.totalorder %s29, 3
      %p220 = por %p218, %p219
      %p222 = scmp.ne.s32.totalorder %s207, %s221
      %p223 = scmp.eq.s32.totalorder %s29, 0
      %p224 = por %p222, %p223
      %s225 = ssub.s32 %s23, %s30
      %p226 = scmp.eq.s32.totalorder %s225, 0
      %s228 = sadd.s32 %s227, 1
      %s229 = scalar_select %p226, %s227, %s228
      %p232 = pneg %p226
      %p233 = scmp.eq.s32.totalorder %s23, 3
      %p234 = por %p232, %p233
      %p235 = scmp.ne.s32.totalorder %s227, %s230
      %p236 = scmp.eq.s32.totalorder %s23, 0
      %p237 = por %p235, %p236
      %p238 = scmp.ne.s32.totalorder %s227, %s230
      %p239 = scmp.eq.s32.totalorder %s28, 3
      %p240 = por %p238, %p239
      %p241 = scmp.ne.s32.totalorder %s230, %s231
      %p242 = scmp.eq.s32.totalorder %s28, 0
      %p243 = por %p241, %p242
      %p244 = scmp.ne.s32.totalorder %s230, %s231
      %p245 = scmp.eq.s32.totalorder %s29, 3
      %p246 = por %p244, %p245
      %p248 = scmp.ne.s32.totalorder %s231, %s247
      %p249 = scmp.eq.s32.totalorder %s29, 0
      %p250 = por %p248, %p249
      %p251 = scmp.le.s32.totalorder 1, %s23
      %p252 = scmp.lt.s32.totalorder %s23, 5
      %p253 = pnand %p251, %p252
      %p254 = pneg %p253
      // Predicated region
      $region9: #{sae_forward.1} parent=5 // pred_check
        _
      $region10: #{sae_forward.1} parent=5 // pred_check_branch
        %256 = sbr.rel (%p253) target = $region12
      $region11: #{sae_forward.1} parent=5 // pred_region
        %s257 = ssub.s32 %s23, 1
        // Predicated region
        $region13: #{sae_forward.1} parent=11 // pred_check
          %p258 = pneg %p70
        $region14: #{sae_forward.1} parent=11 // pred_check_branch
          %260 = sbr.rel (%p258) target = $region16
        $region15: #{sae_forward.1} parent=11 // pred_region
          %s262 = ssub.s32 2048, 2048
          %263 = vsyncadd [#allocation6], %s262
          %s264 = sshll.u32 [#allocation5], 4
          %s265 = int_to_ptr.vmem [resolvable:$true] %s264
          %270 = dma.hbm_to_vmem [thread:$0]  %s1, 2048, %s265, [#allocation6], 128, 128, 8
        $region16: #{sae_forward.1} parent=11 // pred_fallthru
          _
        // Predicated region
        $region17: #{sae_forward.1} parent=11 // pred_check
          %p271 = pneg %p91
        $region18: #{sae_forward.1} parent=11 // pred_check_branch
          %273 = sbr.rel (%p271) target = $region20
        $region19: #{sae_forward.1} parent=11 // pred_region
          _
        $region20: #{sae_forward.1} parent=11 // pred_fallthru
          _
        // Predicated region
        $region21: #{sae_forward.1} parent=11 // pred_check
          %p274 = pneg %p112
        $region22: #{sae_forward.1} parent=11 // pred_check_branch
          %276 = sbr.rel (%p274) target = $region24
        $region23: #{sae_forward.1} parent=11 // pred_region
          %s278 = ssub.s32 2048, 2048
          %279 = vsyncadd [#allocation6], %s278
          %s280 = sshll.u32 [#allocation7], 4
          %s281 = int_to_ptr.vmem [resolvable:$true] %s280
          %286 = dma.hbm_to_vmem [thread:$0]  %s3, 2048, %s281, [#allocation6], 128, 128, 8
        $region24: #{sae_forward.1} parent=11 // pred_fallthru
          _
        // Predicated region
        $region25: #{sae_forward.1} parent=11 // pred_check
          %p287 = pneg %p133
        $region26: #{sae_forward.1} parent=11 // pred_check_branch
          %289 = sbr.rel (%p287) target = $region28
        $region27: #{sae_forward.1} parent=11 // pred_region
          _
        $region28: #{sae_forward.1} parent=11 // pred_fallthru
          _
        // Predicated region
        $region29: #{sae_forward.1} parent=11 // pred_check
          %p290 = pneg %p154
        $region30: #{sae_forward.1} parent=11 // pred_check_branch
          %292 = sbr.rel (%p290) target = $region32
        $region31: #{sae_forward.1} parent=11 // pred_region
          %s294 = ssub.s32 2048, 2048
          %295 = vsyncadd [#allocation9], %s294
          %s296 = sshll.u32 [#allocation8], 4
          %s297 = int_to_ptr.vmem [resolvable:$true] %s296
          %302 = dma.hbm_to_vmem [thread:$0]  %s5, 2048, %s297, [#allocation9], 128, 128, 8
        $region32: #{sae_forward.1} parent=11 // pred_fallthru
          _
        // Predicated region
        $region33: #{sae_forward.1} parent=11 // pred_check
          %p303 = pneg %p175
        $region34: #{sae_forward.1} parent=11 // pred_check_branch
          %305 = sbr.rel (%p303) target = $region36
        $region35: #{sae_forward.1} parent=11 // pred_region
          _
        $region36: #{sae_forward.1} parent=11 // pred_fallthru
          _
        // Predicated region
        $region37: #{sae_forward.1} parent=11 // pred_check
          %p306 = pneg %p196
        $region38: #{sae_forward.1} parent=11 // pred_check_branch
          %308 = sbr.rel (%p306) target = $region40
        $region39: #{sae_forward.1} parent=11 // pred_region
          %s310 = ssub.s32 2048, 2048
          %311 = vsyncadd [#allocation9], %s310
          %s312 = sshll.u32 [#allocation10], 4
          %s313 = int_to_ptr.vmem [resolvable:$true] %s312
          %318 = dma.hbm_to_vmem [thread:$0]  %s7, 2048, %s313, [#allocation9], 128, 128, 8
        $region40: #{sae_forward.1} parent=11 // pred_fallthru
          _
        // Predicated region
        $region41: #{sae_forward.1} parent=11 // pred_check
          %p319 = pneg %p217
        $region42: #{sae_forward.1} parent=11 // pred_check_branch
          %321 = sbr.rel (%p319) target = $region44
        $region43: #{sae_forward.1} parent=11 // pred_region
          _
        $region44: #{sae_forward.1} parent=11 // pred_fallthru
          _
      $region12: #{sae_forward.1} parent=5 // pred_fallthru
        _
      %p322 = scmp.lt.s32.totalorder %s23, 4
      // Predicated region
      $region45: #{sae_forward.1} parent=5 // pred_check
        %p323 = pneg %p322
      $region46: #{sae_forward.1} parent=5 // pred_check_branch
        %325 = sbr.rel (%p323) target = $region48
      $region47: #{sae_forward.1} parent=5 // pred_region
        // Predicated region
        $region49: #{sae_forward.1} parent=47 // pred_check
          %p326 = pneg %p43
        $region50: #{sae_forward.1} parent=47 // pred_check_branch
          %328 = sbr.rel (%p326) target = $region52
        $region51: #{sae_forward.1} parent=47 // pred_region
          %s329 = sand.u32 %s33, 1
          %s330 = scalar_lea.sflag [#allocation3], %s329
          %s331 = sand.u32 %s33, 1
          %s332 = smul.addr %s331, 256
          %s333 = scalar_lea.vmem [#allocation2], %s332
          %s334 = smul.u32 32, %s23
          %s336 = ssub.s32 4096, 4096
          %337 = vsyncadd %s330, %s336
          %s338 = smul.addr %s334, 128
          %s339 = scalar_lea.hbm %s0, %s338
          %s340 = sshll.u32 %s333, 4
          %s341 = int_to_ptr.vmem [resolvable:$true] %s340
          %346 = dma.hbm_to_vmem [thread:$0]  %s339, 4096, %s341, %s330, 128, 128, 8
        $region52: #{sae_forward.1} parent=47 // pred_fallthru
          _
      $region48: #{sae_forward.1} parent=5 // pred_fallthru
        _
      %p347 = scmp.le.s32.totalorder 1, %s23
      %p348 = scmp.lt.s32.totalorder %s23, 5
      %p349 = pnand %p347, %p348
      %p350 = pneg %p349
      // Predicated region
      $region53: #{sae_forward.1} parent=5 // pred_check
        _
      $region54: #{sae_forward.1} parent=5 // pred_check_branch
        %352 = sbr.rel (%p349) target = $region56
      $region55: #{sae_forward.1} parent=5 // pred_region
        %s353 = ssub.s32 %s23, 1
        %s354 = sand.u32 %s36, 1
        %s355 = scalar_lea.sflag [#allocation3], %s354
        %s356 = sand.u32 %s36, 1
        %s357 = smul.addr %s356, 256
        %s358 = scalar_lea.vmem [#allocation2], %s357
        // Predicated region
        $region57: #{sae_forward.1} parent=55 // pred_check
          %p359 = pneg %p49
        $region58: #{sae_forward.1} parent=55 // pred_check_branch
          %361 = sbr.rel (%p359) target = $region60
        $region59: #{sae_forward.1} parent=55 // pred_region
          %362 = dma.done %s355, 4096
        $region60: #{sae_forward.1} parent=55 // pred_fallthru
          _
        // Predicated region
        $region61: #{sae_forward.1} parent=55 // pred_check
          %p363 = pneg %p70
        $region62: #{sae_forward.1} parent=55 // pred_check_branch
          %365 = sbr.rel (%p363) target = $region64
        $region63: #{sae_forward.1} parent=55 // pred_region
          %366 = dma.done [#allocation6], 2048
        $region64: #{sae_forward.1} parent=55 // pred_fallthru
          _
        // Predicated region
        $region65: #{sae_forward.1} parent=55 // pred_check
          %p367 = pneg %p112
        $region66: #{sae_forward.1} parent=55 // pred_check_branch
          %369 = sbr.rel (%p367) target = $region68
        $region67: #{sae_forward.1} parent=55 // pred_region
          %370 = dma.done [#allocation6], 2048
        $region68: #{sae_forward.1} parent=55 // pred_fallthru
          _
        // Predicated region
        $region69: #{sae_forward.1} parent=55 // pred_check
          %p371 = pneg %p154
        $region70: #{sae_forward.1} parent=55 // pred_check_branch
          %373 = sbr.rel (%p371) target = $region72
        $region71: #{sae_forward.1} parent=55 // pred_region
          %374 = dma.done [#allocation9], 2048
        $region72: #{sae_forward.1} parent=55 // pred_fallthru
          _
        // Predicated region
        $region73: #{sae_forward.1} parent=55 // pred_check
          %p375 = pneg %p196
        $region74: #{sae_forward.1} parent=55 // pred_check_branch
          %377 = sbr.rel (%p375) target = $region76
        $region75: #{sae_forward.1} parent=55 // pred_region
          %378 = dma.done [#allocation9], 2048
        $region76: #{sae_forward.1} parent=55 // pred_fallthru
          _
        %s379 = sand.u32 %s36, 1
        %s380 = scalar_lea.sflag [#allocation3], %s379
        %s381 = sand.u32 %s36, 1
        %s382 = smul.addr %s381, 256
        %s383 = scalar_lea.vmem [#allocation2], %s382
        %p384 = pneg %p49
        %p385 = pneg %p46
        %p386 = pneg %p70
        %p387 = pneg %p67
        %p388 = pneg %p91
        %p389 = pneg %p88
        %p390 = pneg %p112
        %p391 = pneg %p109
        %p392 = pneg %p133
        %p393 = pneg %p130
        %p394 = pneg %p154
        %p395 = pneg %p151
        %p396 = pneg %p175
        %p397 = pneg %p172
        %p398 = pneg %p196
        %p399 = pneg %p193
        %p400 = pneg %p217
        %p401 = pneg %p214
        %p402 = pneg %p243
        %p403 = pneg %p240
        %s404 = sand.u32 %s230, 1
        %s405 = scalar_lea.sflag [#allocation4], %s404
        %s406 = sand.u32 %s230, 1
        %s407 = smul.addr %s406, 256
        %s408 = scalar_lea.vmem [#allocation11], %s407
        %s409 = smul.u32 32, %s28
        %s410 = smul.u32 32, %s28
        %v411 = vld [vmem:[%s358] sm:$0xff]
        %v412 = vld [vmem:[%s358 + $0x8] sm:$0xff]
        %v413 = vld [vmem:[%s358 + $0x10] sm:$0xff]
        %v414 = vld [vmem:[%s358 + $0x18] sm:$0xff]
        %v415 = vld [vmem:[%s358 + $0x20] sm:$0xff]
        %v416 = vld [vmem:[%s358 + $0x28] sm:$0xff]
        %v417 = vld [vmem:[%s358 + $0x30] sm:$0xff]
        %v418 = vld [vmem:[%s358 + $0x38] sm:$0xff]
        %v419 = vld [vmem:[%s358 + $0x40] sm:$0xff]
        %v420 = vld [vmem:[%s358 + $0x48] sm:$0xff]
        %v421 = vld [vmem:[%s358 + $0x50] sm:$0xff]
        %v422 = vld [vmem:[%s358 + $0x58] sm:$0xff]
        %v423 = vld [vmem:[%s358 + $0x60] sm:$0xff]
        %v424 = vld [vmem:[%s358 + $0x68] sm:$0xff]
        %v425 = vld [vmem:[%s358 + $0x70] sm:$0xff]
        %v426 = vld [vmem:[%s358 + $0x78] sm:$0xff]
        %v427 = vld [vmem:[%s358 + $0x80] sm:$0xff]
        %v428 = vld [vmem:[%s358 + $0x88] sm:$0xff]
        %v429 = vld [vmem:[%s358 + $0x90] sm:$0xff]
        %v430 = vld [vmem:[%s358 + $0x98] sm:$0xff]
        %v431 = vld [vmem:[%s358 + $0xa0] sm:$0xff]
        %v432 = vld [vmem:[%s358 + $0xa8] sm:$0xff]
        %v433 = vld [vmem:[%s358 + $0xb0] sm:$0xff]
        %v434 = vld [vmem:[%s358 + $0xb8] sm:$0xff]
        %v435 = vld [vmem:[%s358 + $0xc0] sm:$0xff]
        %v436 = vld [vmem:[%s358 + $0xc8] sm:$0xff]
        %v437 = vld [vmem:[%s358 + $0xd0] sm:$0xff]
        %v438 = vld [vmem:[%s358 + $0xd8] sm:$0xff]
        %v439 = vld [vmem:[%s358 + $0xe0] sm:$0xff]
        %v440 = vld [vmem:[%s358 + $0xe8] sm:$0xff]
        %v441 = vld [vmem:[%s358 + $0xf0] sm:$0xff]
        %v442 = vld [vmem:[%s358 + $0xf8] sm:$0xff]
        %v443 = vld [vmem:[#allocation5] sm:$0xff]
        %v444 = vld [vmem:[#allocation5 + $0x8] sm:$0xff]
        %v445 = vld [vmem:[#allocation5 + $0x10] sm:$0xff]
        %v446 = vld [vmem:[#allocation5 + $0x18] sm:$0xff]
        %v447 = vld [vmem:[#allocation5 + $0x20] sm:$0xff]
        %v448 = vld [vmem:[#allocation5 + $0x28] sm:$0xff]
        %v449 = vld [vmem:[#allocation5 + $0x30] sm:$0xff]
        %v450 = vld [vmem:[#allocation5 + $0x38] sm:$0xff]
        %v451 = vld [vmem:[#allocation5 + $0x40] sm:$0xff]
        %v452 = vld [vmem:[#allocation5 + $0x48] sm:$0xff]
        %v453 = vld [vmem:[#allocation5 + $0x50] sm:$0xff]
        %v454 = vld [vmem:[#allocation5 + $0x58] sm:$0xff]
        %v455 = vld [vmem:[#allocation5 + $0x60] sm:$0xff]
        %v456 = vld [vmem:[#allocation5 + $0x68] sm:$0xff]
        %v457 = vld [vmem:[#allocation5 + $0x70] sm:$0xff]
        %v458 = vld [vmem:[#allocation5 + $0x78] sm:$0xff]
        %v459 = vld [vmem:[%s2] sm:$0x1]
        %v461 = vlaneseq
        %v462 = vshrl.u32 %v461, 7
        %v463 = vsub.s32 0, %v462
        %v464 = vrot.slane %v459, %v463
        %466 = vmatprep.subr.mxu0 0.0
        %467 = vmatpush1.msra.mxu0 %v443
        %468 = vmatprep.subr.mxu0 0.0
        %469 = vmatpush1.msra.mxu0 %v444
        %470 = vmatprep.subr.mxu0 0.0
        %471 = vmatpush1.msra.mxu0 %v445
        %472 = vmatprep.subr.mxu0 0.0
        %473 = vmatpush1.msra.mxu0 %v446
        %474 = vmatprep.subr.mxu0 0.0
        %475 = vmatpush1.msra.mxu0 %v447
        %476 = vmatprep.subr.mxu0 0.0
        %477 = vmatpush1.msra.mxu0 %v448
        %478 = vmatprep.subr.mxu0 0.0
        %479 = vmatpush1.msra.mxu0 %v449
        %480 = vmatprep.subr.mxu0 0.0
        %481 = vmatpush1.msra.mxu0 %v450
        %482 = vmatprep.subr.mxu0 0.0
        %483 = vmatpush1.msra.mxu0 %v451
        %484 = vmatprep.subr.mxu0 0.0
        %485 = vmatpush1.msra.mxu0 %v452
        %486 = vmatprep.subr.mxu0 0.0
        %487 = vmatpush1.msra.mxu0 %v453
        %488 = vmatprep.subr.mxu0 0.0
        %489 = vmatpush1.msra.mxu0 %v454
        %490 = vmatprep.subr.mxu0 0.0
        %491 = vmatpush1.msra.mxu0 %v455
        %492 = vmatprep.subr.mxu0 0.0
        %493 = vmatpush1.msra.mxu0 %v456
        %494 = vmatprep.subr.mxu0 0.0
        %495 = vmatpush1.msra.mxu0 %v457
        %496 = vmatprep.subr.mxu0 0.0
        %497 = vmatpush1.msra.mxu0 %v458
        %498 = vmatprep.subr.mxu0 0.0
        %499 = vmatpush1.msra.mxu0 0.0
        %500 = vmatprep.subr.mxu0 0.0
        %501 = vmatpush1.msra.mxu0 0.0
        %502 = vmatprep.subr.mxu0 0.0
        %503 = vmatpush1.msra.mxu0 0.0
        %504 = vmatprep.subr.mxu0 0.0
        %505 = vmatpush1.msra.mxu0 0.0
        %506 = vmatprep.subr.mxu0 0.0
        %507 = vmatpush1.msra.mxu0 0.0
        %508 = vmatprep.subr.mxu0 0.0
        %509 = vmatpush1.msra.mxu0 0.0
        %510 = vmatprep.subr.mxu0 0.0
        %511 = vmatpush1.msra.mxu0 0.0
        %512 = vmatprep.subr.mxu0 0.0
        %513 = vmatpush1.msra.mxu0 0.0
        %514 = vmatprep.subr.mxu0 0.0
        %515 = vmatpush1.msra.mxu0 0.0
        %516 = vmatprep.subr.mxu0 0.0
        %517 = vmatpush1.msra.mxu0 0.0
        %518 = vmatprep.subr.mxu0 0.0
        %519 = vmatpush1.msra.mxu0 0.0
        %520 = vmatprep.subr.mxu0 0.0
        %521 = vmatpush1.msra.mxu0 0.0
        %522 = vmatprep.subr.mxu0 0.0
        %523 = vmatpush1.msra.mxu0 0.0
        %524 = vmatprep.subr.mxu0 0.0
        %525 = vmatpush1.msra.mxu0 0.0
        %526 = vmatprep.subr.mxu0 0.0
        %527 = vmatpush1.msra.mxu0 0.0
        %528 = vmatprep.subr.mxu0 0.0
        %529 = vmatpush1.msra.mxu0 0.0
        %530 = vmatprep.mubr.f32.mxu0 0.0
        %531 = vmatmul.mubr.f32.gmra.mrb[0].mxu0 %v411
        %v532 = vpop.f32.mrb[0].mxu0
        %v533 = vadd.f32 %v464, %v532
        %v534 = vpop.f32.mrb[0].mxu0
        %535 = vmatprep.mubr.f32.mxu0 0.0
        %536 = vmatmul.mubr.f32.gmra.mrb[0].mxu0 %v412
        %v537 = vpop.f32.mrb[0].mxu0
        %v538 = vadd.f32 %v464, %v537
        %v539 = vpop.f32.mrb[0].mxu0
        %540 = vmatprep.mubr.f32.mxu0 0.0
        %541 = vmatmul.mubr.f32.gmra.mrb[0].mxu0 %v413
        %v542 = vpop.f32.mrb[0].mxu0
        %v543 = vadd.f32 %v464, %v542
        %v544 = vpop.f32.mrb[0].mxu0
        %545 = vmatprep.mubr.f32.mxu0 0.0
        %546 = vmatmul.mubr.f32.gmra.mrb[0].mxu0 %v414
        %v547 = vpop.f32.mrb[0].mxu0
        %v548 = vadd.f32 %v464, %v547
        %v549 = vpop.f32.mrb[0].mxu0
        %550 = vmatprep.mubr.f32.mxu0 0.0
        %551 = vmatmul.mubr.f32.gmra.mrb[0].mxu0 %v415
        %v552 = vpop.f32.mrb[0].mxu0
        %v553 = vadd.f32 %v464, %v552
        %v554 = vpop.f32.mrb[0].mxu0
        %555 = vmatprep.mubr.f32.mxu0 0.0
        %556 = vmatmul.mubr.f32.gmra.mrb[0].mxu0 %v416
        %v557 = vpop.f32.mrb[0].mxu0
        %v558 = vadd.f32 %v464, %v557
        %v559 = vpop.f32.mrb[0].mxu0
        %560 = vmatprep.mubr.f32.mxu0 0.0
        %561 = vmatmul.mubr.f32.gmra.mrb[0].mxu0 %v417
        %v562 = vpop.f32.mrb[0].mxu0
        %v563 = vadd.f32 %v464, %v562
        %v564 = vpop.f32.mrb[0].mxu0
        %565 = vmatprep.mubr.f32.mxu0 0.0
        %566 = vmatmul.mubr.f32.gmra.mrb[0].mxu0 %v418
        %v567 = vpop.f32.mrb[0].mxu0
        %v568 = vadd.f32 %v464, %v567
        %v569 = vpop.f32.mrb[0].mxu0
        %570 = vmatprep.mubr.f32.mxu0 0.0
        %571 = vmatmul.mubr.f32.gmra.mrb[0].mxu0 %v419
        %v572 = vpop.f32.mrb[0].mxu0
        %v573 = vadd.f32 %v464, %v572
        %v574 = vpop.f32.mrb[0].mxu0
        %575 = vmatprep.mubr.f32.mxu0 0.0
        %576 = vmatmul.mubr.f32.gmra.mrb[0].mxu0 %v420
        %v577 = vpop.f32.mrb[0].mxu0
        %v578 = vadd.f32 %v464, %v577
        %v579 = vpop.f32.mrb[0].mxu0
        %580 = vmatprep.mubr.f32.mxu0 0.0
        %581 = vmatmul.mubr.f32.gmra.mrb[0].mxu0 %v421
        %v582 = vpop.f32.mrb[0].mxu0
        %v583 = vadd.f32 %v464, %v582
        %v584 = vpop.f32.mrb[0].mxu0
        %585 = vmatprep.mubr.f32.mxu0 0.0
        %586 = vmatmul.mubr.f32.gmra.mrb[0].mxu0 %v422
        %v587 = vpop.f32.mrb[0].mxu0
        %v588 = vadd.f32 %v464, %v587
        %v589 = vpop.f32.mrb[0].mxu0
        %590 = vmatprep.mubr.f32.mxu0 0.0
        %591 = vmatmul.mubr.f32.gmra.mrb[0].mxu0 %v423
        %v592 = vpop.f32.mrb[0].mxu0
        %v593 = vadd.f32 %v464, %v592
        %v594 = vpop.f32.mrb[0].mxu0
        %595 = vmatprep.mubr.f32.mxu0 0.0
        %596 = vmatmul.mubr.f32.gmra.mrb[0].mxu0 %v424
        %v597 = vpop.f32.mrb[0].mxu0
        %v598 = vadd.f32 %v464, %v597
        %v599 = vpop.f32.mrb[0].mxu0
        %600 = vmatprep.mubr.f32.mxu0 0.0
        %601 = vmatmul.mubr.f32.gmra.mrb[0].mxu0 %v425
        %v602 = vpop.f32.mrb[0].mxu0
        %v603 = vadd.f32 %v464, %v602
        %v604 = vpop.f32.mrb[0].mxu0
        %605 = vmatprep.mubr.f32.mxu0 0.0
        %606 = vmatmul.mubr.f32.gmra.mrb[0].mxu0 %v426
        %v607 = vpop.f32.mrb[0].mxu0
        %v608 = vadd.f32 %v464, %v607
        %v609 = vpop.f32.mrb[0].mxu0
        %610 = vmatprep.mubr.f32.mxu0 0.0
        %611 = vmatmul.mubr.f32.gmra.mrb[0].mxu0 %v427
        %v612 = vpop.f32.mrb[0].mxu0
        %v613 = vadd.f32 %v464, %v612
        %v614 = vpop.f32.mrb[0].mxu0
        %615 = vmatprep.mubr.f32.mxu0 0.0
        %616 = vmatmul.mubr.f32.gmra.mrb[0].mxu0 %v428
        %v617 = vpop.f32.mrb[0].mxu0
        %v618 = vadd.f32 %v464, %v617
        %v619 = vpop.f32.mrb[0].mxu0
        %620 = vmatprep.mubr.f32.mxu0 0.0
        %621 = vmatmul.mubr.f32.gmra.mrb[0].mxu0 %v429
        %v622 = vpop.f32.mrb[0].mxu0
        %v623 = vadd.f32 %v464, %v622
        %v624 = vpop.f32.mrb[0].mxu0
        %625 = vmatprep.mubr.f32.mxu0 0.0
        %626 = vmatmul.mubr.f32.gmra.mrb[0].mxu0 %v430
        %v627 = vpop.f32.mrb[0].mxu0
        %v628 = vadd.f32 %v464, %v627
        %v629 = vpop.f32.mrb[0].mxu0
        %630 = vmatprep.mubr.f32.mxu0 0.0
        %631 = vmatmul.mubr.f32.gmra.mrb[0].mxu0 %v431
        %v632 = vpop.f32.mrb[0].mxu0
        %v633 = vadd.f32 %v464, %v632
        %v634 = vpop.f32.mrb[0].mxu0
        %635 = vmatprep.mubr.f32.mxu0 0.0
        %636 = vmatmul.mubr.f32.gmra.mrb[0].mxu0 %v432
        %v637 = vpop.f32.mrb[0].mxu0
        %v638 = vadd.f32 %v464, %v637
        %v639 = vpop.f32.mrb[0].mxu0
        %640 = vmatprep.mubr.f32.mxu0 0.0
        %641 = vmatmul.mubr.f32.gmra.mrb[0].mxu0 %v433
        %v642 = vpop.f32.mrb[0].mxu0
        %v643 = vadd.f32 %v464, %v642
        %v644 = vpop.f32.mrb[0].mxu0
        %645 = vmatprep.mubr.f32.mxu0 0.0
        %646 = vmatmul.mubr.f32.gmra.mrb[0].mxu0 %v434
        %v647 = vpop.f32.mrb[0].mxu0
        %v648 = vadd.f32 %v464, %v647
        %v649 = vpop.f32.mrb[0].mxu0
        %650 = vmatprep.mubr.f32.mxu0 0.0
        %651 = vmatmul.mubr.f32.gmra.mrb[0].mxu0 %v435
        %v652 = vpop.f32.mrb[0].mxu0
        %v653 = vadd.f32 %v464, %v652
        %v654 = vpop.f32.mrb[0].mxu0
        %655 = vmatprep.mubr.f32.mxu0 0.0
        %656 = vmatmul.mubr.f32.gmra.mrb[0].mxu0 %v436
        %v657 = vpop.f32.mrb[0].mxu0
        %v658 = vadd.f32 %v464, %v657
        %v659 = vpop.f32.mrb[0].mxu0
        %660 = vmatprep.mubr.f32.mxu0 0.0
        %661 = vmatmul.mubr.f32.gmra.mrb[0].mxu0 %v437
        %v662 = vpop.f32.mrb[0].mxu0
        %v663 = vadd.f32 %v464, %v662
        %v664 = vpop.f32.mrb[0].mxu0
        %665 = vmatprep.mubr.f32.mxu0 0.0
        %666 = vmatmul.mubr.f32.gmra.mrb[0].mxu0 %v438
        %v667 = vpop.f32.mrb[0].mxu0
        %v668 = vadd.f32 %v464, %v667
        %v669 = vpop.f32.mrb[0].mxu0
        %670 = vmatprep.mubr.f32.mxu0 0.0
        %671 = vmatmul.mubr.f32.gmra.mrb[0].mxu0 %v439
        %v672 = vpop.f32.mrb[0].mxu0
        %v673 = vadd.f32 %v464, %v672
        %v674 = vpop.f32.mrb[0].mxu0
        %675 = vmatprep.mubr.f32.mxu0 0.0
        %676 = vmatmul.mubr.f32.gmra.mrb[0].mxu0 %v440
        %v677 = vpop.f32.mrb[0].mxu0
        %v678 = vadd.f32 %v464, %v677
        %v679 = vpop.f32.mrb[0].mxu0
        %680 = vmatprep.mubr.f32.mxu0 0.0
        %681 = vmatmul.mubr.f32.gmra.mrb[0].mxu0 %v441
        %v682 = vpop.f32.mrb[0].mxu0
        %v683 = vadd.f32 %v464, %v682
        %v684 = vpop.f32.mrb[0].mxu0
        %685 = vmatprep.mubr.f32.mxu0 0.0
        %686 = vmatmul.mubr.f32.gmra.mrb[0].mxu0 %v442
        %v687 = vpop.f32.mrb[0].mxu0
        %v688 = vadd.f32 %v464, %v687
        %v689 = vpop.f32.mrb[0].mxu0
        %690 = vdwg.mxu0
        %v691 = vsub.f32 0.0, %v533
        %v692 = vsub.f32 0.0, %v538
        %v693 = vsub.f32 0.0, %v543
        %v694 = vsub.f32 0.0, %v548
        %v695 = vsub.f32 0.0, %v553
        %v696 = vsub.f32 0.0, %v558
        %v697 = vsub.f32 0.0, %v563
        %v698 = vsub.f32 0.0, %v568
        %v699 = vsub.f32 0.0, %v573
        %v700 = vsub.f32 0.0, %v578
        %v701 = vsub.f32 0.0, %v583
        %v702 = vsub.f32 0.0, %v588
        %v703 = vsub.f32 0.0, %v593
        %v704 = vsub.f32 0.0, %v598
        %v705 = vsub.f32 0.0, %v603
        %v706 = vsub.f32 0.0, %v608
        %v707 = vsub.f32 0.0, %v613
        %v708 = vsub.f32 0.0, %v618
        %v709 = vsub.f32 0.0, %v623
        %v710 = vsub.f32 0.0, %v628
        %v711 = vsub.f32 0.0, %v633
        %v712 = vsub.f32 0.0, %v638
        %v713 = vsub.f32 0.0, %v643
        %v714 = vsub.f32 0.0, %v648
        %v715 = vsub.f32 0.0, %v653
        %v716 = vsub.f32 0.0, %v658
        %v717 = vsub.f32 0.0, %v663
        %v718 = vsub.f32 0.0, %v668
        %v719 = vsub.f32 0.0, %v673
        %v720 = vsub.f32 0.0, %v678
        %v721 = vsub.f32 0.0, %v683
        %v722 = vsub.f32 0.0, %v688
        %v723 = vmul.f32 %v691, 1.442695
        %v724 = vpow.pop %v723
        %v725 = vmul.f32 %v692, 1.442695
        %v726 = vpow.pop %v725
        %v727 = vmul.f32 %v693, 1.442695
        %v728 = vpow.pop %v727
        %v729 = vmul.f32 %v694, 1.442695
        %v730 = vpow.pop %v729
        %v731 = vmul.f32 %v695, 1.442695
        %v732 = vpow.pop %v731
        %v733 = vmul.f32 %v696, 1.442695
        %v734 = vpow.pop %v733
        %v735 = vmul.f32 %v697, 1.442695
        %v736 = vpow.pop %v735
        %v737 = vmul.f32 %v698, 1.442695
        %v738 = vpow.pop %v737
        %v739 = vmul.f32 %v699, 1.442695
        %v740 = vpow.pop %v739
        %v741 = vmul.f32 %v700, 1.442695
        %v742 = vpow.pop %v741
        %v743 = vmul.f32 %v701, 1.442695
        %v744 = vpow.pop %v743
        %v745 = vmul.f32 %v702, 1.442695
        %v746 = vpow.pop %v745
        %v747 = vmul.f32 %v703, 1.442695
        %v748 = vpow.pop %v747
        %v749 = vmul.f32 %v704, 1.442695
        %v750 = vpow.pop %v749
        %v751 = vmul.f32 %v705, 1.442695
        %v752 = vpow.pop %v751
        %v753 = vmul.f32 %v706, 1.442695
        %v754 = vpow.pop %v753
        %v755 = vmul.f32 %v707, 1.442695
        %v756 = vpow.pop %v755
        %v757 = vmul.f32 %v708, 1.442695
        %v758 = vpow.pop %v757
        %v759 = vmul.f32 %v709, 1.442695
        %v760 = vpow.pop %v759
        %v761 = vmul.f32 %v710, 1.442695
        %v762 = vpow.pop %v761
        %v763 = vmul.f32 %v711, 1.442695
        %v764 = vpow.pop %v763
        %v765 = vmul.f32 %v712, 1.442695
        %v766 = vpow.pop %v765
        %v767 = vmul.f32 %v713, 1.442695
        %v768 = vpow.pop %v767
        %v769 = vmul.f32 %v714, 1.442695
        %v770 = vpow.pop %v769
        %v771 = vmul.f32 %v715, 1.442695
        %v772 = vpow.pop %v771
        %v773 = vmul.f32 %v716, 1.442695
        %v774 = vpow.pop %v773
        %v775 = vmul.f32 %v717, 1.442695
        %v776 = vpow.pop %v775
        %v777 = vmul.f32 %v718, 1.442695
        %v778 = vpow.pop %v777
        %v779 = vmul.f32 %v719, 1.442695
        %v780 = vpow.pop %v779
        %v781 = vmul.f32 %v720, 1.442695
        %v782 = vpow.pop %v781
        %v783 = vmul.f32 %v721, 1.442695
        %v784 = vpow.pop %v783
        %v785 = vmul.f32 %v722, 1.442695
        %v786 = vpow.pop %v785
        %v787 = vadd.f32 %v724, 1.0
        %v788 = vadd.f32 %v726, 1.0
        %v789 = vadd.f32 %v728, 1.0
        %v790 = vadd.f32 %v730, 1.0
        %v791 = vadd.f32 %v732, 1.0
        %v792 = vadd.f32 %v734, 1.0
        %v793 = vadd.f32 %v736, 1.0
        %v794 = vadd.f32 %v738, 1.0
        %v795 = vadd.f32 %v740, 1.0
        %v796 = vadd.f32 %v742, 1.0
        %v797 = vadd.f32 %v744, 1.0
        %v798 = vadd.f32 %v746, 1.0
        %v799 = vadd.f32 %v748, 1.0
        %v800 = vadd.f32 %v750, 1.0
        %v801 = vadd.f32 %v752, 1.0
        %v802 = vadd.f32 %v754, 1.0
        %v803 = vadd.f32 %v756, 1.0
        %v804 = vadd.f32 %v758, 1.0
        %v805 = vadd.f32 %v760, 1.0
        %v806 = vadd.f32 %v762, 1.0
        %v807 = vadd.f32 %v764, 1.0
        %v808 = vadd.f32 %v766, 1.0
        %v809 = vadd.f32 %v768, 1.0
        %v810 = vadd.f32 %v770, 1.0
        %v811 = vadd.f32 %v772, 1.0
        %v812 = vadd.f32 %v774, 1.0
        %v813 = vadd.f32 %v776, 1.0
        %v814 = vadd.f32 %v778, 1.0
        %v815 = vadd.f32 %v780, 1.0
        %v816 = vadd.f32 %v782, 1.0
        %v817 = vadd.f32 %v784, 1.0
        %v818 = vadd.f32 %v786, 1.0
        %v819 = vrcp.pop %v787
        %v820 = vmul.f32 1.0, %v819
        %v821 = vrcp.pop %v788
        %v822 = vmul.f32 1.0, %v821
        %v823 = vrcp.pop %v789
        %v824 = vmul.f32 1.0, %v823
        %v825 = vrcp.pop %v790
        %v826 = vmul.f32 1.0, %v825
        %v827 = vrcp.pop %v791
        %v828 = vmul.f32 1.0, %v827
        %v829 = vrcp.pop %v792
        %v830 = vmul.f32 1.0, %v829
        %v831 = vrcp.pop %v793
        %v832 = vmul.f32 1.0, %v831
        %v833 = vrcp.pop %v794
        %v834 = vmul.f32 1.0, %v833
        %v835 = vrcp.pop %v795
        %v836 = vmul.f32 1.0, %v835
        %v837 = vrcp.pop %v796
        %v838 = vmul.f32 1.0, %v837
        %v839 = vrcp.pop %v797
        %v840 = vmul.f32 1.0, %v839
        %v841 = vrcp.pop %v798
        %v842 = vmul.f32 1.0, %v841
        %v843 = vrcp.pop %v799
        %v844 = vmul.f32 1.0, %v843
        %v845 = vrcp.pop %v800
        %v846 = vmul.f32 1.0, %v845
        %v847 = vrcp.pop %v801
        %v848 = vmul.f32 1.0, %v847
        %v849 = vrcp.pop %v802
        %v850 = vmul.f32 1.0, %v849
        %v851 = vrcp.pop %v803
        %v852 = vmul.f32 1.0, %v851
        %v853 = vrcp.pop %v804
        %v854 = vmul.f32 1.0, %v853
        %v855 = vrcp.pop %v805
        %v856 = vmul.f32 1.0, %v855
        %v857 = vrcp.pop %v806
        %v858 = vmul.f32 1.0, %v857
        %v859 = vrcp.pop %v807
        %v860 = vmul.f32 1.0, %v859
        %v861 = vrcp.pop %v808
        %v862 = vmul.f32 1.0, %v861
        %v863 = vrcp.pop %v809
        %v864 = vmul.f32 1.0, %v863
        %v865 = vrcp.pop %v810
        %v866 = vmul.f32 1.0, %v865
        %v867 = vrcp.pop %v811
        %v868 = vmul.f32 1.0, %v867
        %v869 = vrcp.pop %v812
        %v870 = vmul.f32 1.0, %v869
        %v871 = vrcp.pop %v813
        %v872 = vmul.f32 1.0, %v871
        %v873 = vrcp.pop %v814
        %v874 = vmul.f32 1.0, %v873
        %v875 = vrcp.pop %v815
        %v876 = vmul.f32 1.0, %v875
        %v877 = vrcp.pop %v816
        %v878 = vmul.f32 1.0, %v877
        %v879 = vrcp.pop %v817
        %v880 = vmul.f32 1.0, %v879
        %v881 = vrcp.pop %v818
        %v882 = vmul.f32 1.0, %v881
        %v883 = vld [vmem:[#allocation7] sm:$0xff]
        %v884 = vld [vmem:[#allocation7 + $0x8] sm:$0xff]
        %v885 = vld [vmem:[#allocation7 + $0x10] sm:$0xff]
        %v886 = vld [vmem:[#allocation7 + $0x18] sm:$0xff]
        %v887 = vld [vmem:[#allocation7 + $0x20] sm:$0xff]
        %v888 = vld [vmem:[#allocation7 + $0x28] sm:$0xff]
        %v889 = vld [vmem:[#allocation7 + $0x30] sm:$0xff]
        %v890 = vld [vmem:[#allocation7 + $0x38] sm:$0xff]
        %v891 = vld [vmem:[#allocation7 + $0x40] sm:$0xff]
        %v892 = vld [vmem:[#allocation7 + $0x48] sm:$0xff]
        %v893 = vld [vmem:[#allocation7 + $0x50] sm:$0xff]
        %v894 = vld [vmem:[#allocation7 + $0x58] sm:$0xff]
        %v895 = vld [vmem:[#allocation7 + $0x60] sm:$0xff]
        %v896 = vld [vmem:[#allocation7 + $0x68] sm:$0xff]
        %v897 = vld [vmem:[#allocation7 + $0x70] sm:$0xff]
        %v898 = vld [vmem:[#allocation7 + $0x78] sm:$0xff]
        %v899 = vld [vmem:[%s4] sm:$0x1]
        %v901 = vlaneseq
        %v902 = vshrl.u32 %v901, 7
        %v903 = vsub.s32 0, %v902
        %v904 = vrot.slane %v899, %v903
        %906 = vmatprep.subr.mxu0 0.0
        %907 = vmatpush1.msra.mxu0 %v883
        %908 = vmatprep.subr.mxu0 0.0
        %909 = vmatpush1.msra.mxu0 %v884
        %910 = vmatprep.subr.mxu0 0.0
        %911 = vmatpush1.msra.mxu0 %v885
        %912 = vmatprep.subr.mxu0 0.0
        %913 = vmatpush1.msra.mxu0 %v886
        %914 = vmatprep.subr.mxu0 0.0
        %915 = vmatpush1.msra.mxu0 %v887
        %916 = vmatprep.subr.mxu0 0.0
        %917 = vmatpush1.msra.mxu0 %v888
        %918 = vmatprep.subr.mxu0 0.0
        %919 = vmatpush1.msra.mxu0 %v889
        %920 = vmatprep.subr.mxu0 0.0
        %921 = vmatpush1.msra.mxu0 %v890
        %922 = vmatprep.subr.mxu0 0.0
        %923 = vmatpush1.msra.mxu0 %v891
        %924 = vmatprep.subr.mxu0 0.0
        %925 = vmatpush1.msra.mxu0 %v892
        %926 = vmatprep.subr.mxu0 0.0
        %927 = vmatpush1.msra.mxu0 %v893
        %928 = vmatprep.subr.mxu0 0.0
        %929 = vmatpush1.msra.mxu0 %v894
        %930 = vmatprep.subr.mxu0 0.0
        %931 = vmatpush1.msra.mxu0 %v895
        %932 = vmatprep.subr.mxu0 0.0
        %933 = vmatpush1.msra.mxu0 %v896
        %934 = vmatprep.subr.mxu0 0.0
        %935 = vmatpush1.msra.mxu0 %v897
        %936 = vmatprep.subr.mxu0 0.0
        %937 = vmatpush1.msra.mxu0 %v898
        %938 = vmatprep.subr.mxu0 0.0
        %939 = vmatpush1.msra.mxu0 0.0
        %940 = vmatprep.subr.mxu0 0.0
        %941 = vmatpush1.msra.mxu0 0.0
        %942 = vmatprep.subr.mxu0 0.0
        %943 = vmatpush1.msra.mxu0 0.0
        %944 = vmatprep.subr.mxu0 0.0
        %945 = vmatpush1.msra.mxu0 0.0
        %946 = vmatprep.subr.mxu0 0.0
        %947 = vmatpush1.msra.mxu0 0.0
        %948 = vmatprep.subr.mxu0 0.0
        %949 = vmatpush1.msra.mxu0 0.0
        %950 = vmatprep.subr.mxu0 0.0
        %951 = vmatpush1.msra.mxu0 0.0
        %952 = vmatprep.subr.mxu0 0.0
        %953 = vmatpush1.msra.mxu0 0.0
        %954 = vmatprep.subr.mxu0 0.0
        %955 = vmatpush1.msra.mxu0 0.0
        %956 = vmatprep.subr.mxu0 0.0
        %957 = vmatpush1.msra.mxu0 0.0
        %958 = vmatprep.subr.mxu0 0.0
        %959 = vmatpush1.msra.mxu0 0.0
        %960 = vmatprep.subr.mxu0 0.0
        %961 = vmatpush1.msra.mxu0 0.0
        %962 = vmatprep.subr.mxu0 0.0
        %963 = vmatpush1.msra.mxu0 0.0
        %964 = vmatprep.subr.mxu0 0.0
        %965 = vmatpush1.msra.mxu0 0.0
        %966 = vmatprep.subr.mxu0 0.0
        %967 = vmatpush1.msra.mxu0 0.0
        %968 = vmatprep.subr.mxu0 0.0
        %969 = vmatpush1.msra.mxu0 0.0
        %970 = vmatprep.mubr.f32.mxu0 0.0
        %971 = vmatmul.mubr.f32.gmra.mrb[0].mxu0 %v820
        %v972 = vpop.f32.mrb[0].mxu0
        %v973 = vadd.f32 %v904, %v972
        %v974 = vpop.f32.mrb[0].mxu0
        %975 = vmatprep.mubr.f32.mxu0 0.0
        %976 = vmatmul.mubr.f32.gmra.mrb[0].mxu0 %v822
        %v977 = vpop.f32.mrb[0].mxu0
        %v978 = vadd.f32 %v904, %v977
        %v979 = vpop.f32.mrb[0].mxu0
        %980 = vmatprep.mubr.f32.mxu0 0.0
        %981 = vmatmul.mubr.f32.gmra.mrb[0].mxu0 %v824
        %v982 = vpop.f32.mrb[0].mxu0
        %v983 = vadd.f32 %v904, %v982
        %v984 = vpop.f32.mrb[0].mxu0
        %985 = vmatprep.mubr.f32.mxu0 0.0
        %986 = vmatmul.mubr.f32.gmra.mrb[0].mxu0 %v826
        %v987 = vpop.f32.mrb[0].mxu0
        %v988 = vadd.f32 %v904, %v987
        %v989 = vpop.f32.mrb[0].mxu0
        %990 = vmatprep.mubr.f32.mxu0 0.0
        %991 = vmatmul.mubr.f32.gmra.mrb[0].mxu0 %v828
        %v992 = vpop.f32.mrb[0].mxu0
        %v993 = vadd.f32 %v904, %v992
        %v994 = vpop.f32.mrb[0].mxu0
        %995 = vmatprep.mubr.f32.mxu0 0.0
        %996 = vmatmul.mubr.f32.gmra.mrb[0].mxu0 %v830
        %v997 = vpop.f32.mrb[0].mxu0
        %v998 = vadd.f32 %v904, %v997
        %v999 = vpop.f32.mrb[0].mxu0
        %1000 = vmatprep.mubr.f32.mxu0 0.0
        %1001 = vmatmul.mubr.f32.gmra.mrb[0].mxu0 %v832
        %v1002 = vpop.f32.mrb[0].mxu0
        %v1003 = vadd.f32 %v904, %v1002
        %v1004 = vpop.f32.mrb[0].mxu0
        %1005 = vmatprep.mubr.f32.mxu0 0.0
        %1006 = vmatmul.mubr.f32.gmra.mrb[0].mxu0 %v834
        %v1007 = vpop.f32.mrb[0].mxu0
        %v1008 = vadd.f32 %v904, %v1007
        %v1009 = vpop.f32.mrb[0].mxu0
        %1010 = vmatprep.mubr.f32.mxu0 0.0
        %1011 = vmatmul.mubr.f32.gmra.mrb[0].mxu0 %v836
        %v1012 = vpop.f32.mrb[0].mxu0
        %v1013 = vadd.f32 %v904, %v1012
        %v1014 = vpop.f32.mrb[0].mxu0
        %1015 = vmatprep.mubr.f32.mxu0 0.0
        %1016 = vmatmul.mubr.f32.gmra.mrb[0].mxu0 %v838
        %v1017 = vpop.f32.mrb[0].mxu0
        %v1018 = vadd.f32 %v904, %v1017
        %v1019 = vpop.f32.mrb[0].mxu0
        %1020 = vmatprep.mubr.f32.mxu0 0.0
        %1021 = vmatmul.mubr.f32.gmra.mrb[0].mxu0 %v840
        %v1022 = vpop.f32.mrb[0].mxu0
        %v1023 = vadd.f32 %v904, %v1022
        %v1024 = vpop.f32.mrb[0].mxu0
        %1025 = vmatprep.mubr.f32.mxu0 0.0
        %1026 = vmatmul.mubr.f32.gmra.mrb[0].mxu0 %v842
        %v1027 = vpop.f32.mrb[0].mxu0
        %v1028 = vadd.f32 %v904, %v1027
        %v1029 = vpop.f32.mrb[0].mxu0
        %1030 = vmatprep.mubr.f32.mxu0 0.0
        %1031 = vmatmul.mubr.f32.gmra.mrb[0].mxu0 %v844
        %v1032 = vpop.f32.mrb[0].mxu0
        %v1033 = vadd.f32 %v904, %v1032
        %v1034 = vpop.f32.mrb[0].mxu0
        %1035 = vmatprep.mubr.f32.mxu0 0.0
        %1036 = vmatmul.mubr.f32.gmra.mrb[0].mxu0 %v846
        %v1037 = vpop.f32.mrb[0].mxu0
        %v1038 = vadd.f32 %v904, %v1037
        %v1039 = vpop.f32.mrb[0].mxu0
        %1040 = vmatprep.mubr.f32.mxu0 0.0
        %1041 = vmatmul.mubr.f32.gmra.mrb[0].mxu0 %v848
        %v1042 = vpop.f32.mrb[0].mxu0
        %v1043 = vadd.f32 %v904, %v1042
        %v1044 = vpop.f32.mrb[0].mxu0
        %1045 = vmatprep.mubr.f32.mxu0 0.0
        %1046 = vmatmul.mubr.f32.gmra.mrb[0].mxu0 %v850
        %v1047 = vpop.f32.mrb[0].mxu0
        %v1048 = vadd.f32 %v904, %v1047
        %v1049 = vpop.f32.mrb[0].mxu0
        %1050 = vmatprep.mubr.f32.mxu0 0.0
        %1051 = vmatmul.mubr.f32.gmra.mrb[0].mxu0 %v852
        %v1052 = vpop.f32.mrb[0].mxu0
        %v1053 = vadd.f32 %v904, %v1052
        %v1054 = vpop.f32.mrb[0].mxu0
        %1055 = vmatprep.mubr.f32.mxu0 0.0
        %1056 = vmatmul.mubr.f32.gmra.mrb[0].mxu0 %v854
        %v1057 = vpop.f32.mrb[0].mxu0
        %v1058 = vadd.f32 %v904, %v1057
        %v1059 = vpop.f32.mrb[0].mxu0
        %1060 = vmatprep.mubr.f32.mxu0 0.0
        %1061 = vmatmul.mubr.f32.gmra.mrb[0].mxu0 %v856
        %v1062 = vpop.f32.mrb[0].mxu0
        %v1063 = vadd.f32 %v904, %v1062
        %v1064 = vpop.f32.mrb[0].mxu0
        %1065 = vmatprep.mubr.f32.mxu0 0.0
        %1066 = vmatmul.mubr.f32.gmra.mrb[0].mxu0 %v858
        %v1067 = vpop.f32.mrb[0].mxu0
        %v1068 = vadd.f32 %v904, %v1067
        %v1069 = vpop.f32.mrb[0].mxu0
        %1070 = vmatprep.mubr.f32.mxu0 0.0
        %1071 = vmatmul.mubr.f32.gmra.mrb[0].mxu0 %v860
        %v1072 = vpop.f32.mrb[0].mxu0
        %v1073 = vadd.f32 %v904, %v1072
        %v1074 = vpop.f32.mrb[0].mxu0
        %1075 = vmatprep.mubr.f32.mxu0 0.0
        %1076 = vmatmul.mubr.f32.gmra.mrb[0].mxu0 %v862
        %v1077 = vpop.f32.mrb[0].mxu0
        %v1078 = vadd.f32 %v904, %v1077
        %v1079 = vpop.f32.mrb[0].mxu0
        %1080 = vmatprep.mubr.f32.mxu0 0.0
        %1081 = vmatmul.mubr.f32.gmra.mrb[0].mxu0 %v864
        %v1082 = vpop.f32.mrb[0].mxu0
        %v1083 = vadd.f32 %v904, %v1082
        %v1084 = vpop.f32.mrb[0].mxu0
        %1085 = vmatprep.mubr.f32.mxu0 0.0
        %1086 = vmatmul.mubr.f32.gmra.mrb[0].mxu0 %v866
        %v1087 = vpop.f32.mrb[0].mxu0
        %v1088 = vadd.f32 %v904, %v1087
        %v1089 = vpop.f32.mrb[0].mxu0
        %1090 = vmatprep.mubr.f32.mxu0 0.0
        %1091 = vmatmul.mubr.f32.gmra.mrb[0].mxu0 %v868
        %v1092 = vpop.f32.mrb[0].mxu0
        %v1093 = vadd.f32 %v904, %v1092
        %v1094 = vpop.f32.mrb[0].mxu0
        %1095 = vmatprep.mubr.f32.mxu0 0.0
        %1096 = vmatmul.mubr.f32.gmra.mrb[0].mxu0 %v870
        %v1097 = vpop.f32.mrb[0].mxu0
        %v1098 = vadd.f32 %v904, %v1097
        %v1099 = vpop.f32.mrb[0].mxu0
        %1100 = vmatprep.mubr.f32.mxu0 0.0
        %1101 = vmatmul.mubr.f32.gmra.mrb[0].mxu0 %v872
        %v1102 = vpop.f32.mrb[0].mxu0
        %v1103 = vadd.f32 %v904, %v1102
        %v1104 = vpop.f32.mrb[0].mxu0
        %1105 = vmatprep.mubr.f32.mxu0 0.0
        %1106 = vmatmul.mubr.f32.gmra.mrb[0].mxu0 %v874
        %v1107 = vpop.f32.mrb[0].mxu0
        %v1108 = vadd.f32 %v904, %v1107
        %v1109 = vpop.f32.mrb[0].mxu0
        %1110 = vmatprep.mubr.f32.mxu0 0.0
        %1111 = vmatmul.mubr.f32.gmra.mrb[0].mxu0 %v876
        %v1112 = vpop.f32.mrb[0].mxu0
        %v1113 = vadd.f32 %v904, %v1112
        %v1114 = vpop.f32.mrb[0].mxu0
        %1115 = vmatprep.mubr.f32.mxu0 0.0
        %1116 = vmatmul.mubr.f32.gmra.mrb[0].mxu0 %v878
        %v1117 = vpop.f32.mrb[0].mxu0
        %v1118 = vadd.f32 %v904, %v1117
        %v1119 = vpop.f32.mrb[0].mxu0
        %1120 = vmatprep.mubr.f32.mxu0 0.0
        %1121 = vmatmul.mubr.f32.gmra.mrb[0].mxu0 %v880
        %v1122 = vpop.f32.mrb[0].mxu0
        %v1123 = vadd.f32 %v904, %v1122
        %v1124 = vpop.f32.mrb[0].mxu0
        %1125 = vmatprep.mubr.f32.mxu0 0.0
        %1126 = vmatmul.mubr.f32.gmra.mrb[0].mxu0 %v882
        %v1127 = vpop.f32.mrb[0].mxu0
        %v1128 = vadd.f32 %v904, %v1127
        %v1129 = vpop.f32.mrb[0].mxu0
        %1130 = vdwg.mxu0
        %v1131 = vsub.f32 0.0, %v973
        %v1132 = vsub.f32 0.0, %v978
        %v1133 = vsub.f32 0.0, %v983
        %v1134 = vsub.f32 0.0, %v988
        %v1135 = vsub.f32 0.0, %v993
        %v1136 = vsub.f32 0.0, %v998
        %v1137 = vsub.f32 0.0, %v1003
        %v1138 = vsub.f32 0.0, %v1008
        %v1139 = vsub.f32 0.0, %v1013
        %v1140 = vsub.f32 0.0, %v1018
        %v1141 = vsub.f32 0.0, %v1023
        %v1142 = vsub.f32 0.0, %v1028
        %v1143 = vsub.f32 0.0, %v1033
        %v1144 = vsub.f32 0.0, %v1038
        %v1145 = vsub.f32 0.0, %v1043
        %v1146 = vsub.f32 0.0, %v1048
        %v1147 = vsub.f32 0.0, %v1053
        %v1148 = vsub.f32 0.0, %v1058
        %v1149 = vsub.f32 0.0, %v1063
        %v1150 = vsub.f32 0.0, %v1068
        %v1151 = vsub.f32 0.0, %v1073
        %v1152 = vsub.f32 0.0, %v1078
        %v1153 = vsub.f32 0.0, %v1083
        %v1154 = vsub.f32 0.0, %v1088
        %v1155 = vsub.f32 0.0, %v1093
        %v1156 = vsub.f32 0.0, %v1098
        %v1157 = vsub.f32 0.0, %v1103
        %v1158 = vsub.f32 0.0, %v1108
        %v1159 = vsub.f32 0.0, %v1113
        %v1160 = vsub.f32 0.0, %v1118
        %v1161 = vsub.f32 0.0, %v1123
        %v1162 = vsub.f32 0.0, %v1128
        %v1163 = vmul.f32 %v1131, 1.442695
        %v1164 = vpow.pop %v1163
        %v1165 = vmul.f32 %v1132, 1.442695
        %v1166 = vpow.pop %v1165
        %v1167 = vmul.f32 %v1133, 1.442695
        %v1168 = vpow.pop %v1167
        %v1169 = vmul.f32 %v1134, 1.442695
        %v1170 = vpow.pop %v1169
        %v1171 = vmul.f32 %v1135, 1.442695
        %v1172 = vpow.pop %v1171
        %v1173 = vmul.f32 %v1136, 1.442695
        %v1174 = vpow.pop %v1173
        %v1175 = vmul.f32 %v1137, 1.442695
        %v1176 = vpow.pop %v1175
        %v1177 = vmul.f32 %v1138, 1.442695
        %v1178 = vpow.pop %v1177
        %v1179 = vmul.f32 %v1139, 1.442695
        %v1180 = vpow.pop %v1179
        %v1181 = vmul.f32 %v1140, 1.442695
        %v1182 = vpow.pop %v1181
        %v1183 = vmul.f32 %v1141, 1.442695
        %v1184 = vpow.pop %v1183
        %v1185 = vmul.f32 %v1142, 1.442695
        %v1186 = vpow.pop %v1185
        %v1187 = vmul.f32 %v1143, 1.442695
        %v1188 = vpow.pop %v1187
        %v1189 = vmul.f32 %v1144, 1.442695
        %v1190 = vpow.pop %v1189
        %v1191 = vmul.f32 %v1145, 1.442695
        %v1192 = vpow.pop %v1191
        %v1193 = vmul.f32 %v1146, 1.442695
        %v1194 = vpow.pop %v1193
        %v1195 = vmul.f32 %v1147, 1.442695
        %v1196 = vpow.pop %v1195
        %v1197 = vmul.f32 %v1148, 1.442695
        %v1198 = vpow.pop %v1197
        %v1199 = vmul.f32 %v1149, 1.442695
        %v1200 = vpow.pop %v1199
        %v1201 = vmul.f32 %v1150, 1.442695
        %v1202 = vpow.pop %v1201
        %v1203 = vmul.f32 %v1151, 1.442695
        %v1204 = vpow.pop %v1203
        %v1205 = vmul.f32 %v1152, 1.442695
        %v1206 = vpow.pop %v1205
        %v1207 = vmul.f32 %v1153, 1.442695
        %v1208 = vpow.pop %v1207
        %v1209 = vmul.f32 %v1154, 1.442695
        %v1210 = vpow.pop %v1209
        %v1211 = vmul.f32 %v1155, 1.442695
        %v1212 = vpow.pop %v1211
        %v1213 = vmul.f32 %v1156, 1.442695
        %v1214 = vpow.pop %v1213
        %v1215 = vmul.f32 %v1157, 1.442695
        %v1216 = vpow.pop %v1215
        %v1217 = vmul.f32 %v1158, 1.442695
        %v1218 = vpow.pop %v1217
        %v1219 = vmul.f32 %v1159, 1.442695
        %v1220 = vpow.pop %v1219
        %v1221 = vmul.f32 %v1160, 1.442695
        %v1222 = vpow.pop %v1221
        %v1223 = vmul.f32 %v1161, 1.442695
        %v1224 = vpow.pop %v1223
        %v1225 = vmul.f32 %v1162, 1.442695
        %v1226 = vpow.pop %v1225
        %v1227 = vadd.f32 %v1164, 1.0
        %v1228 = vadd.f32 %v1166, 1.0
        %v1229 = vadd.f32 %v1168, 1.0
        %v1230 = vadd.f32 %v1170, 1.0
        %v1231 = vadd.f32 %v1172, 1.0
        %v1232 = vadd.f32 %v1174, 1.0
        %v1233 = vadd.f32 %v1176, 1.0
        %v1234 = vadd.f32 %v1178, 1.0
        %v1235 = vadd.f32 %v1180, 1.0
        %v1236 = vadd.f32 %v1182, 1.0
        %v1237 = vadd.f32 %v1184, 1.0
        %v1238 = vadd.f32 %v1186, 1.0
        %v1239 = vadd.f32 %v1188, 1.0
        %v1240 = vadd.f32 %v1190, 1.0
        %v1241 = vadd.f32 %v1192, 1.0
        %v1242 = vadd.f32 %v1194, 1.0
        %v1243 = vadd.f32 %v1196, 1.0
        %v1244 = vadd.f32 %v1198, 1.0
        %v1245 = vadd.f32 %v1200, 1.0
        %v1246 = vadd.f32 %v1202, 1.0
        %v1247 = vadd.f32 %v1204, 1.0
        %v1248 = vadd.f32 %v1206, 1.0
        %v1249 = vadd.f32 %v1208, 1.0
        %v1250 = vadd.f32 %v1210, 1.0
        %v1251 = vadd.f32 %v1212, 1.0
        %v1252 = vadd.f32 %v1214, 1.0
        %v1253 = vadd.f32 %v1216, 1.0
        %v1254 = vadd.f32 %v1218, 1.0
        %v1255 = vadd.f32 %v1220, 1.0
        %v1256 = vadd.f32 %v1222, 1.0
        %v1257 = vadd.f32 %v1224, 1.0
        %v1258 = vadd.f32 %v1226, 1.0
        %v1259 = vrcp.pop %v1227
        %v1260 = vmul.f32 1.0, %v1259
        %v1261 = vrcp.pop %v1228
        %v1262 = vmul.f32 1.0, %v1261
        %v1263 = vrcp.pop %v1229
        %v1264 = vmul.f32 1.0, %v1263
        %v1265 = vrcp.pop %v1230
        %v1266 = vmul.f32 1.0, %v1265
        %v1267 = vrcp.pop %v1231
        %v1268 = vmul.f32 1.0, %v1267
        %v1269 = vrcp.pop %v1232
        %v1270 = vmul.f32 1.0, %v1269
        %v1271 = vrcp.pop %v1233
        %v1272 = vmul.f32 1.0, %v1271
        %v1273 = vrcp.pop %v1234
        %v1274 = vmul.f32 1.0, %v1273
        %v1275 = vrcp.pop %v1235
        %v1276 = vmul.f32 1.0, %v1275
        %v1277 = vrcp.pop %v1236
        %v1278 = vmul.f32 1.0, %v1277
        %v1279 = vrcp.pop %v1237
        %v1280 = vmul.f32 1.0, %v1279
        %v1281 = vrcp.pop %v1238
        %v1282 = vmul.f32 1.0, %v1281
        %v1283 = vrcp.pop %v1239
        %v1284 = vmul.f32 1.0, %v1283
        %v1285 = vrcp.pop %v1240
        %v1286 = vmul.f32 1.0, %v1285
        %v1287 = vrcp.pop %v1241
        %v1288 = vmul.f32 1.0, %v1287
        %v1289 = vrcp.pop %v1242
        %v1290 = vmul.f32 1.0, %v1289
        %v1291 = vrcp.pop %v1243
        %v1292 = vmul.f32 1.0, %v1291
        %v1293 = vrcp.pop %v1244
        %v1294 = vmul.f32 1.0, %v1293
        %v1295 = vrcp.pop %v1245
        %v1296 = vmul.f32 1.0, %v1295
        %v1297 = vrcp.pop %v1246
        %v1298 = vmul.f32 1.0, %v1297
        %v1299 = vrcp.pop %v1247
        %v1300 = vmul.f32 1.0, %v1299
        %v1301 = vrcp.pop %v1248
        %v1302 = vmul.f32 1.0, %v1301
        %v1303 = vrcp.pop %v1249
        %v1304 = vmul.f32 1.0, %v1303
        %v1305 = vrcp.pop %v1250
        %v1306 = vmul.f32 1.0, %v1305
        %v1307 = vrcp.pop %v1251
        %v1308 = vmul.f32 1.0, %v1307
        %v1309 = vrcp.pop %v1252
        %v1310 = vmul.f32 1.0, %v1309
        %v1311 = vrcp.pop %v1253
        %v1312 = vmul.f32 1.0, %v1311
        %v1313 = vrcp.pop %v1254
        %v1314 = vmul.f32 1.0, %v1313
        %v1315 = vrcp.pop %v1255
        %v1316 = vmul.f32 1.0, %v1315
        %v1317 = vrcp.pop %v1256
        %v1318 = vmul.f32 1.0, %v1317
        %v1319 = vrcp.pop %v1257
        %v1320 = vmul.f32 1.0, %v1319
        %v1321 = vrcp.pop %v1258
        %v1322 = vmul.f32 1.0, %v1321
        %v1323 = vld [vmem:[#allocation8] sm:$0xff]
        %v1324 = vld [vmem:[#allocation8 + $0x8] sm:$0xff]
        %v1325 = vld [vmem:[#allocation8 + $0x10] sm:$0xff]
        %v1326 = vld [vmem:[#allocation8 + $0x18] sm:$0xff]
        %v1327 = vld [vmem:[#allocation8 + $0x20] sm:$0xff]
        %v1328 = vld [vmem:[#allocation8 + $0x28] sm:$0xff]
        %v1329 = vld [vmem:[#allocation8 + $0x30] sm:$0xff]
        %v1330 = vld [vmem:[#allocation8 + $0x38] sm:$0xff]
        %v1331 = vld [vmem:[#allocation8 + $0x40] sm:$0xff]
        %v1332 = vld [vmem:[#allocation8 + $0x48] sm:$0xff]
        %v1333 = vld [vmem:[#allocation8 + $0x50] sm:$0xff]
        %v1334 = vld [vmem:[#allocation8 + $0x58] sm:$0xff]
        %v1335 = vld [vmem:[#allocation8 + $0x60] sm:$0xff]
        %v1336 = vld [vmem:[#allocation8 + $0x68] sm:$0xff]
        %v1337 = vld [vmem:[#allocation8 + $0x70] sm:$0xff]
        %v1338 = vld [vmem:[#allocation8 + $0x78] sm:$0xff]
        %v1339 = vld [vmem:[%s6] sm:$0x1]
        %v1341 = vlaneseq
        %v1342 = vshrl.u32 %v1341, 7
        %v1343 = vsub.s32 0, %v1342
        %v1344 = vrot.slane %v1339, %v1343
        %1346 = vmatprep.subr.mxu0 0.0
        %1347 = vmatpush1.msra.mxu0 %v1323
        %1348 = vmatprep.subr.mxu0 0.0
        %1349 = vmatpush1.msra.mxu0 %v1324
        %1350 = vmatprep.subr.mxu0 0.0
        %1351 = vmatpush1.msra.mxu0 %v1325
        %1352 = vmatprep.subr.mxu0 0.0
        %1353 = vmatpush1.msra.mxu0 %v1326
        %1354 = vmatprep.subr.mxu0 0.0
        %1355 = vmatpush1.msra.mxu0 %v1327
        %1356 = vmatprep.subr.mxu0 0.0
        %1357 = vmatpush1.msra.mxu0 %v1328
        %1358 = vmatprep.subr.mxu0 0.0
        %1359 = vmatpush1.msra.mxu0 %v1329
        %1360 = vmatprep.subr.mxu0 0.0
        %1361 = vmatpush1.msra.mxu0 %v1330
        %1362 = vmatprep.subr.mxu0 0.0
        %1363 = vmatpush1.msra.mxu0 %v1331
        %1364 = vmatprep.subr.mxu0 0.0
        %1365 = vmatpush1.msra.mxu0 %v1332
        %1366 = vmatprep.subr.mxu0 0.0
        %1367 = vmatpush1.msra.mxu0 %v1333
        %1368 = vmatprep.subr.mxu0 0.0
        %1369 = vmatpush1.msra.mxu0 %v1334
        %1370 = vmatprep.subr.mxu0 0.0
        %1371 = vmatpush1.msra.mxu0 %v1335
        %1372 = vmatprep.subr.mxu0 0.0
        %1373 = vmatpush1.msra.mxu0 %v1336
        %1374 = vmatprep.subr.mxu0 0.0
        %1375 = vmatpush1.msra.mxu0 %v1337
        %1376 = vmatprep.subr.mxu0 0.0
        %1377 = vmatpush1.msra.mxu0 %v1338
        %1378 = vmatprep.subr.mxu0 0.0
        %1379 = vmatpush1.msra.mxu0 0.0
        %1380 = vmatprep.subr.mxu0 0.0
        %1381 = vmatpush1.msra.mxu0 0.0
        %1382 = vmatprep.subr.mxu0 0.0
        %1383 = vmatpush1.msra.mxu0 0.0
        %1384 = vmatprep.subr.mxu0 0.0
        %1385 = vmatpush1.msra.mxu0 0.0
        %1386 = vmatprep.subr.mxu0 0.0
        %1387 = vmatpush1.msra.mxu0 0.0
        %1388 = vmatprep.subr.mxu0 0.0
        %1389 = vmatpush1.msra.mxu0 0.0
        %1390 = vmatprep.subr.mxu0 0.0
        %1391 = vmatpush1.msra.mxu0 0.0
        %1392 = vmatprep.subr.mxu0 0.0
        %1393 = vmatpush1.msra.mxu0 0.0
        %1394 = vmatprep.subr.mxu0 0.0
        %1395 = vmatpush1.msra.mxu0 0.0
        %1396 = vmatprep.subr.mxu0 0.0
        %1397 = vmatpush1.msra.mxu0 0.0
        %1398 = vmatprep.subr.mxu0 0.0
        %1399 = vmatpush1.msra.mxu0 0.0
        %1400 = vmatprep.subr.mxu0 0.0
        %1401 = vmatpush1.msra.mxu0 0.0
        %1402 = vmatprep.subr.mxu0 0.0
        %1403 = vmatpush1.msra.mxu0 0.0
        %1404 = vmatprep.subr.mxu0 0.0
        %1405 = vmatpush1.msra.mxu0 0.0
        %1406 = vmatprep.subr.mxu0 0.0
        %1407 = vmatpush1.msra.mxu0 0.0
        %1408 = vmatprep.subr.mxu0 0.0
        %1409 = vmatpush1.msra.mxu0 0.0
        %1410 = vmatprep.mubr.f32.mxu0 0.0
        %1411 = vmatmul.mubr.f32.gmra.mrb[0].mxu0 %v1260
        %v1412 = vpop.f32.mrb[0].mxu0
        %v1413 = vadd.f32 %v1344, %v1412
        %v1414 = vpop.f32.mrb[0].mxu0
        %1415 = vmatprep.mubr.f32.mxu0 0.0
        %1416 = vmatmul.mubr.f32.gmra.mrb[0].mxu0 %v1262
        %v1417 = vpop.f32.mrb[0].mxu0
        %v1418 = vadd.f32 %v1344, %v1417
        %v1419 = vpop.f32.mrb[0].mxu0
        %1420 = vmatprep.mubr.f32.mxu0 0.0
        %1421 = vmatmul.mubr.f32.gmra.mrb[0].mxu0 %v1264
        %v1422 = vpop.f32.mrb[0].mxu0
        %v1423 = vadd.f32 %v1344, %v1422
        %v1424 = vpop.f32.mrb[0].mxu0
        %1425 = vmatprep.mubr.f32.mxu0 0.0
        %1426 = vmatmul.mubr.f32.gmra.mrb[0].mxu0 %v1266
        %v1427 = vpop.f32.mrb[0].mxu0
        %v1428 = vadd.f32 %v1344, %v1427
        %v1429 = vpop.f32.mrb[0].mxu0
        %1430 = vmatprep.mubr.f32.mxu0 0.0
        %1431 = vmatmul.mubr.f32.gmra.mrb[0].mxu0 %v1268
        %v1432 = vpop.f32.mrb[0].mxu0
        %v1433 = vadd.f32 %v1344, %v1432
        %v1434 = vpop.f32.mrb[0].mxu0
        %1435 = vmatprep.mubr.f32.mxu0 0.0
        %1436 = vmatmul.mubr.f32.gmra.mrb[0].mxu0 %v1270
        %v1437 = vpop.f32.mrb[0].mxu0
        %v1438 = vadd.f32 %v1344, %v1437
        %v1439 = vpop.f32.mrb[0].mxu0
        %1440 = vmatprep.mubr.f32.mxu0 0.0
        %1441 = vmatmul.mubr.f32.gmra.mrb[0].mxu0 %v1272
        %v1442 = vpop.f32.mrb[0].mxu0
        %v1443 = vadd.f32 %v1344, %v1442
        %v1444 = vpop.f32.mrb[0].mxu0
        %1445 = vmatprep.mubr.f32.mxu0 0.0
        %1446 = vmatmul.mubr.f32.gmra.mrb[0].mxu0 %v1274
        %v1447 = vpop.f32.mrb[0].mxu0
        %v1448 = vadd.f32 %v1344, %v1447
        %v1449 = vpop.f32.mrb[0].mxu0
        %1450 = vmatprep.mubr.f32.mxu0 0.0
        %1451 = vmatmul.mubr.f32.gmra.mrb[0].mxu0 %v1276
        %v1452 = vpop.f32.mrb[0].mxu0
        %v1453 = vadd.f32 %v1344, %v1452
        %v1454 = vpop.f32.mrb[0].mxu0
        %1455 = vmatprep.mubr.f32.mxu0 0.0
        %1456 = vmatmul.mubr.f32.gmra.mrb[0].mxu0 %v1278
        %v1457 = vpop.f32.mrb[0].mxu0
        %v1458 = vadd.f32 %v1344, %v1457
        %v1459 = vpop.f32.mrb[0].mxu0
        %1460 = vmatprep.mubr.f32.mxu0 0.0
        %1461 = vmatmul.mubr.f32.gmra.mrb[0].mxu0 %v1280
        %v1462 = vpop.f32.mrb[0].mxu0
        %v1463 = vadd.f32 %v1344, %v1462
        %v1464 = vpop.f32.mrb[0].mxu0
        %1465 = vmatprep.mubr.f32.mxu0 0.0
        %1466 = vmatmul.mubr.f32.gmra.mrb[0].mxu0 %v1282
        %v1467 = vpop.f32.mrb[0].mxu0
        %v1468 = vadd.f32 %v1344, %v1467
        %v1469 = vpop.f32.mrb[0].mxu0
        %1470 = vmatprep.mubr.f32.mxu0 0.0
        %1471 = vmatmul.mubr.f32.gmra.mrb[0].mxu0 %v1284
        %v1472 = vpop.f32.mrb[0].mxu0
        %v1473 = vadd.f32 %v1344, %v1472
        %v1474 = vpop.f32.mrb[0].mxu0
        %1475 = vmatprep.mubr.f32.mxu0 0.0
        %1476 = vmatmul.mubr.f32.gmra.mrb[0].mxu0 %v1286
        %v1477 = vpop.f32.mrb[0].mxu0
        %v1478 = vadd.f32 %v1344, %v1477
        %v1479 = vpop.f32.mrb[0].mxu0
        %1480 = vmatprep.mubr.f32.mxu0 0.0
        %1481 = vmatmul.mubr.f32.gmra.mrb[0].mxu0 %v1288
        %v1482 = vpop.f32.mrb[0].mxu0
        %v1483 = vadd.f32 %v1344, %v1482
        %v1484 = vpop.f32.mrb[0].mxu0
        %1485 = vmatprep.mubr.f32.mxu0 0.0
        %1486 = vmatmul.mubr.f32.gmra.mrb[0].mxu0 %v1290
        %v1487 = vpop.f32.mrb[0].mxu0
        %v1488 = vadd.f32 %v1344, %v1487
        %v1489 = vpop.f32.mrb[0].mxu0
        %1490 = vmatprep.mubr.f32.mxu0 0.0
        %1491 = vmatmul.mubr.f32.gmra.mrb[0].mxu0 %v1292
        %v1492 = vpop.f32.mrb[0].mxu0
        %v1493 = vadd.f32 %v1344, %v1492
        %v1494 = vpop.f32.mrb[0].mxu0
        %1495 = vmatprep.mubr.f32.mxu0 0.0
        %1496 = vmatmul.mubr.f32.gmra.mrb[0].mxu0 %v1294
        %v1497 = vpop.f32.mrb[0].mxu0
        %v1498 = vadd.f32 %v1344, %v1497
        %v1499 = vpop.f32.mrb[0].mxu0
        %1500 = vmatprep.mubr.f32.mxu0 0.0
        %1501 = vmatmul.mubr.f32.gmra.mrb[0].mxu0 %v1296
        %v1502 = vpop.f32.mrb[0].mxu0
        %v1503 = vadd.f32 %v1344, %v1502
        %v1504 = vpop.f32.mrb[0].mxu0
        %1505 = vmatprep.mubr.f32.mxu0 0.0
        %1506 = vmatmul.mubr.f32.gmra.mrb[0].mxu0 %v1298
        %v1507 = vpop.f32.mrb[0].mxu0
        %v1508 = vadd.f32 %v1344, %v1507
        %v1509 = vpop.f32.mrb[0].mxu0
        %1510 = vmatprep.mubr.f32.mxu0 0.0
        %1511 = vmatmul.mubr.f32.gmra.mrb[0].mxu0 %v1300
        %v1512 = vpop.f32.mrb[0].mxu0
        %v1513 = vadd.f32 %v1344, %v1512
        %v1514 = vpop.f32.mrb[0].mxu0
        %1515 = vmatprep.mubr.f32.mxu0 0.0
        %1516 = vmatmul.mubr.f32.gmra.mrb[0].mxu0 %v1302
        %v1517 = vpop.f32.mrb[0].mxu0
        %v1518 = vadd.f32 %v1344, %v1517
        %v1519 = vpop.f32.mrb[0].mxu0
        %1520 = vmatprep.mubr.f32.mxu0 0.0
        %1521 = vmatmul.mubr.f32.gmra.mrb[0].mxu0 %v1304
        %v1522 = vpop.f32.mrb[0].mxu0
        %v1523 = vadd.f32 %v1344, %v1522
        %v1524 = vpop.f32.mrb[0].mxu0
        %1525 = vmatprep.mubr.f32.mxu0 0.0
        %1526 = vmatmul.mubr.f32.gmra.mrb[0].mxu0 %v1306
        %v1527 = vpop.f32.mrb[0].mxu0
        %v1528 = vadd.f32 %v1344, %v1527
        %v1529 = vpop.f32.mrb[0].mxu0
        %1530 = vmatprep.mubr.f32.mxu0 0.0
        %1531 = vmatmul.mubr.f32.gmra.mrb[0].mxu0 %v1308
        %v1532 = vpop.f32.mrb[0].mxu0
        %v1533 = vadd.f32 %v1344, %v1532
        %v1534 = vpop.f32.mrb[0].mxu0
        %1535 = vmatprep.mubr.f32.mxu0 0.0
        %1536 = vmatmul.mubr.f32.gmra.mrb[0].mxu0 %v1310
        %v1537 = vpop.f32.mrb[0].mxu0
        %v1538 = vadd.f32 %v1344, %v1537
        %v1539 = vpop.f32.mrb[0].mxu0
        %1540 = vmatprep.mubr.f32.mxu0 0.0
        %1541 = vmatmul.mubr.f32.gmra.mrb[0].mxu0 %v1312
        %v1542 = vpop.f32.mrb[0].mxu0
        %v1543 = vadd.f32 %v1344, %v1542
        %v1544 = vpop.f32.mrb[0].mxu0
        %1545 = vmatprep.mubr.f32.mxu0 0.0
        %1546 = vmatmul.mubr.f32.gmra.mrb[0].mxu0 %v1314
        %v1547 = vpop.f32.mrb[0].mxu0
        %v1548 = vadd.f32 %v1344, %v1547
        %v1549 = vpop.f32.mrb[0].mxu0
        %1550 = vmatprep.mubr.f32.mxu0 0.0
        %1551 = vmatmul.mubr.f32.gmra.mrb[0].mxu0 %v1316
        %v1552 = vpop.f32.mrb[0].mxu0
        %v1553 = vadd.f32 %v1344, %v1552
        %v1554 = vpop.f32.mrb[0].mxu0
        %1555 = vmatprep.mubr.f32.mxu0 0.0
        %1556 = vmatmul.mubr.f32.gmra.mrb[0].mxu0 %v1318
        %v1557 = vpop.f32.mrb[0].mxu0
        %v1558 = vadd.f32 %v1344, %v1557
        %v1559 = vpop.f32.mrb[0].mxu0
        %1560 = vmatprep.mubr.f32.mxu0 0.0
        %1561 = vmatmul.mubr.f32.gmra.mrb[0].mxu0 %v1320
        %v1562 = vpop.f32.mrb[0].mxu0
        %v1563 = vadd.f32 %v1344, %v1562
        %v1564 = vpop.f32.mrb[0].mxu0
        %1565 = vmatprep.mubr.f32.mxu0 0.0
        %1566 = vmatmul.mubr.f32.gmra.mrb[0].mxu0 %v1322
        %v1567 = vpop.f32.mrb[0].mxu0
        %v1568 = vadd.f32 %v1344, %v1567
        %v1569 = vpop.f32.mrb[0].mxu0
        %1570 = vdwg.mxu0
        %v1571 = vsub.f32 0.0, %v1413
        %v1572 = vsub.f32 0.0, %v1418
        %v1573 = vsub.f32 0.0, %v1423
        %v1574 = vsub.f32 0.0, %v1428
        %v1575 = vsub.f32 0.0, %v1433
        %v1576 = vsub.f32 0.0, %v1438
        %v1577 = vsub.f32 0.0, %v1443
        %v1578 = vsub.f32 0.0, %v1448
        %v1579 = vsub.f32 0.0, %v1453
        %v1580 = vsub.f32 0.0, %v1458
        %v1581 = vsub.f32 0.0, %v1463
        %v1582 = vsub.f32 0.0, %v1468
        %v1583 = vsub.f32 0.0, %v1473
        %v1584 = vsub.f32 0.0, %v1478
        %v1585 = vsub.f32 0.0, %v1483
        %v1586 = vsub.f32 0.0, %v1488
        %v1587 = vsub.f32 0.0, %v1493
        %v1588 = vsub.f32 0.0, %v1498
        %v1589 = vsub.f32 0.0, %v1503
        %v1590 = vsub.f32 0.0, %v1508
        %v1591 = vsub.f32 0.0, %v1513
        %v1592 = vsub.f32 0.0, %v1518
        %v1593 = vsub.f32 0.0, %v1523
        %v1594 = vsub.f32 0.0, %v1528
        %v1595 = vsub.f32 0.0, %v1533
        %v1596 = vsub.f32 0.0, %v1538
        %v1597 = vsub.f32 0.0, %v1543
        %v1598 = vsub.f32 0.0, %v1548
        %v1599 = vsub.f32 0.0, %v1553
        %v1600 = vsub.f32 0.0, %v1558
        %v1601 = vsub.f32 0.0, %v1563
        %v1602 = vsub.f32 0.0, %v1568
        %v1603 = vmul.f32 %v1571, 1.442695
        %v1604 = vpow.pop %v1603
        %v1605 = vmul.f32 %v1572, 1.442695
        %v1606 = vpow.pop %v1605
        %v1607 = vmul.f32 %v1573, 1.442695
        %v1608 = vpow.pop %v1607
        %v1609 = vmul.f32 %v1574, 1.442695
        %v1610 = vpow.pop %v1609
        %v1611 = vmul.f32 %v1575, 1.442695
        %v1612 = vpow.pop %v1611
        %v1613 = vmul.f32 %v1576, 1.442695
        %v1614 = vpow.pop %v1613
        %v1615 = vmul.f32 %v1577, 1.442695
        %v1616 = vpow.pop %v1615
        %v1617 = vmul.f32 %v1578, 1.442695
        %v1618 = vpow.pop %v1617
        %v1619 = vmul.f32 %v1579, 1.442695
        %v1620 = vpow.pop %v1619
        %v1621 = vmul.f32 %v1580, 1.442695
        %v1622 = vpow.pop %v1621
        %v1623 = vmul.f32 %v1581, 1.442695
        %v1624 = vpow.pop %v1623
        %v1625 = vmul.f32 %v1582, 1.442695
        %v1626 = vpow.pop %v1625
        %v1627 = vmul.f32 %v1583, 1.442695
        %v1628 = vpow.pop %v1627
        %v1629 = vmul.f32 %v1584, 1.442695
        %v1630 = vpow.pop %v1629
        %v1631 = vmul.f32 %v1585, 1.442695
        %v1632 = vpow.pop %v1631
        %v1633 = vmul.f32 %v1586, 1.442695
        %v1634 = vpow.pop %v1633
        %v1635 = vmul.f32 %v1587, 1.442695
        %v1636 = vpow.pop %v1635
        %v1637 = vmul.f32 %v1588, 1.442695
        %v1638 = vpow.pop %v1637
        %v1639 = vmul.f32 %v1589, 1.442695
        %v1640 = vpow.pop %v1639
        %v1641 = vmul.f32 %v1590, 1.442695
        %v1642 = vpow.pop %v1641
        %v1643 = vmul.f32 %v1591, 1.442695
        %v1644 = vpow.pop %v1643
        %v1645 = vmul.f32 %v1592, 1.442695
        %v1646 = vpow.pop %v1645
        %v1647 = vmul.f32 %v1593, 1.442695
        %v1648 = vpow.pop %v1647
        %v1649 = vmul.f32 %v1594, 1.442695
        %v1650 = vpow.pop %v1649
        %v1651 = vmul.f32 %v1595, 1.442695
        %v1652 = vpow.pop %v1651
        %v1653 = vmul.f32 %v1596, 1.442695
        %v1654 = vpow.pop %v1653
        %v1655 = vmul.f32 %v1597, 1.442695
        %v1656 = vpow.pop %v1655
        %v1657 = vmul.f32 %v1598, 1.442695
        %v1658 = vpow.pop %v1657
        %v1659 = vmul.f32 %v1599, 1.442695
        %v1660 = vpow.pop %v1659
        %v1661 = vmul.f32 %v1600, 1.442695
        %v1662 = vpow.pop %v1661
        %v1663 = vmul.f32 %v1601, 1.442695
        %v1664 = vpow.pop %v1663
        %v1665 = vmul.f32 %v1602, 1.442695
        %v1666 = vpow.pop %v1665
        %v1667 = vadd.f32 %v1604, 1.0
        %v1668 = vadd.f32 %v1606, 1.0
        %v1669 = vadd.f32 %v1608, 1.0
        %v1670 = vadd.f32 %v1610, 1.0
        %v1671 = vadd.f32 %v1612, 1.0
        %v1672 = vadd.f32 %v1614, 1.0
        %v1673 = vadd.f32 %v1616, 1.0
        %v1674 = vadd.f32 %v1618, 1.0
        %v1675 = vadd.f32 %v1620, 1.0
        %v1676 = vadd.f32 %v1622, 1.0
        %v1677 = vadd.f32 %v1624, 1.0
        %v1678 = vadd.f32 %v1626, 1.0
        %v1679 = vadd.f32 %v1628, 1.0
        %v1680 = vadd.f32 %v1630, 1.0
        %v1681 = vadd.f32 %v1632, 1.0
        %v1682 = vadd.f32 %v1634, 1.0
        %v1683 = vadd.f32 %v1636, 1.0
        %v1684 = vadd.f32 %v1638, 1.0
        %v1685 = vadd.f32 %v1640, 1.0
        %v1686 = vadd.f32 %v1642, 1.0
        %v1687 = vadd.f32 %v1644, 1.0
        %v1688 = vadd.f32 %v1646, 1.0
        %v1689 = vadd.f32 %v1648, 1.0
        %v1690 = vadd.f32 %v1650, 1.0
        %v1691 = vadd.f32 %v1652, 1.0
        %v1692 = vadd.f32 %v1654, 1.0
        %v1693 = vadd.f32 %v1656, 1.0
        %v1694 = vadd.f32 %v1658, 1.0
        %v1695 = vadd.f32 %v1660, 1.0
        %v1696 = vadd.f32 %v1662, 1.0
        %v1697 = vadd.f32 %v1664, 1.0
        %v1698 = vadd.f32 %v1666, 1.0
        %v1699 = vrcp.pop %v1667
        %v1700 = vmul.f32 1.0, %v1699
        %v1701 = vrcp.pop %v1668
        %v1702 = vmul.f32 1.0, %v1701
        %v1703 = vrcp.pop %v1669
        %v1704 = vmul.f32 1.0, %v1703
        %v1705 = vrcp.pop %v1670
        %v1706 = vmul.f32 1.0, %v1705
        %v1707 = vrcp.pop %v1671
        %v1708 = vmul.f32 1.0, %v1707
        %v1709 = vrcp.pop %v1672
        %v1710 = vmul.f32 1.0, %v1709
        %v1711 = vrcp.pop %v1673
        %v1712 = vmul.f32 1.0, %v1711
        %v1713 = vrcp.pop %v1674
        %v1714 = vmul.f32 1.0, %v1713
        %v1715 = vrcp.pop %v1675
        %v1716 = vmul.f32 1.0, %v1715
        %v1717 = vrcp.pop %v1676
        %v1718 = vmul.f32 1.0, %v1717
        %v1719 = vrcp.pop %v1677
        %v1720 = vmul.f32 1.0, %v1719
        %v1721 = vrcp.pop %v1678
        %v1722 = vmul.f32 1.0, %v1721
        %v1723 = vrcp.pop %v1679
        %v1724 = vmul.f32 1.0, %v1723
        %v1725 = vrcp.pop %v1680
        %v1726 = vmul.f32 1.0, %v1725
        %v1727 = vrcp.pop %v1681
        %v1728 = vmul.f32 1.0, %v1727
        %v1729 = vrcp.pop %v1682
        %v1730 = vmul.f32 1.0, %v1729
        %v1731 = vrcp.pop %v1683
        %v1732 = vmul.f32 1.0, %v1731
        %v1733 = vrcp.pop %v1684
        %v1734 = vmul.f32 1.0, %v1733
        %v1735 = vrcp.pop %v1685
        %v1736 = vmul.f32 1.0, %v1735
        %v1737 = vrcp.pop %v1686
        %v1738 = vmul.f32 1.0, %v1737
        %v1739 = vrcp.pop %v1687
        %v1740 = vmul.f32 1.0, %v1739
        %v1741 = vrcp.pop %v1688
        %v1742 = vmul.f32 1.0, %v1741
        %v1743 = vrcp.pop %v1689
        %v1744 = vmul.f32 1.0, %v1743
        %v1745 = vrcp.pop %v1690
        %v1746 = vmul.f32 1.0, %v1745
        %v1747 = vrcp.pop %v1691
        %v1748 = vmul.f32 1.0, %v1747
        %v1749 = vrcp.pop %v1692
        %v1750 = vmul.f32 1.0, %v1749
        %v1751 = vrcp.pop %v1693
        %v1752 = vmul.f32 1.0, %v1751
        %v1753 = vrcp.pop %v1694
        %v1754 = vmul.f32 1.0, %v1753
        %v1755 = vrcp.pop %v1695
        %v1756 = vmul.f32 1.0, %v1755
        %v1757 = vrcp.pop %v1696
        %v1758 = vmul.f32 1.0, %v1757
        %v1759 = vrcp.pop %v1697
        %v1760 = vmul.f32 1.0, %v1759
        %v1761 = vrcp.pop %v1698
        %v1762 = vmul.f32 1.0, %v1761
        %v1763 = vld [vmem:[#allocation10] sm:$0xff]
        %v1764 = vld [vmem:[#allocation10 + $0x8] sm:$0xff]
        %v1765 = vld [vmem:[#allocation10 + $0x10] sm:$0xff]
        %v1766 = vld [vmem:[#allocation10 + $0x18] sm:$0xff]
        %v1767 = vld [vmem:[#allocation10 + $0x20] sm:$0xff]
        %v1768 = vld [vmem:[#allocation10 + $0x28] sm:$0xff]
        %v1769 = vld [vmem:[#allocation10 + $0x30] sm:$0xff]
        %v1770 = vld [vmem:[#allocation10 + $0x38] sm:$0xff]
        %v1771 = vld [vmem:[#allocation10 + $0x40] sm:$0xff]
        %v1772 = vld [vmem:[#allocation10 + $0x48] sm:$0xff]
        %v1773 = vld [vmem:[#allocation10 + $0x50] sm:$0xff]
        %v1774 = vld [vmem:[#allocation10 + $0x58] sm:$0xff]
        %v1775 = vld [vmem:[#allocation10 + $0x60] sm:$0xff]
        %v1776 = vld [vmem:[#allocation10 + $0x68] sm:$0xff]
        %v1777 = vld [vmem:[#allocation10 + $0x70] sm:$0xff]
        %v1778 = vld [vmem:[#allocation10 + $0x78] sm:$0xff]
        %v1779 = vld [vmem:[%s8] sm:$0x1]
        %v1781 = vlaneseq
        %v1782 = vshrl.u32 %v1781, 7
        %v1783 = vsub.s32 0, %v1782
        %v1784 = vrot.slane %v1779, %v1783
        %1786 = vmatprep.subr.mxu0 0.0
        %1787 = vmatpush1.msra.mxu0 %v1763
        %1788 = vmatprep.subr.mxu0 0.0
        %1789 = vmatpush1.msra.mxu0 %v1764
        %1790 = vmatprep.subr.mxu0 0.0
        %1791 = vmatpush1.msra.mxu0 %v1765
        %1792 = vmatprep.subr.mxu0 0.0
        %1793 = vmatpush1.msra.mxu0 %v1766
        %1794 = vmatprep.subr.mxu0 0.0
        %1795 = vmatpush1.msra.mxu0 %v1767
        %1796 = vmatprep.subr.mxu0 0.0
        %1797 = vmatpush1.msra.mxu0 %v1768
        %1798 = vmatprep.subr.mxu0 0.0
        %1799 = vmatpush1.msra.mxu0 %v1769
        %1800 = vmatprep.subr.mxu0 0.0
        %1801 = vmatpush1.msra.mxu0 %v1770
        %1802 = vmatprep.subr.mxu0 0.0
        %1803 = vmatpush1.msra.mxu0 %v1771
        %1804 = vmatprep.subr.mxu0 0.0
        %1805 = vmatpush1.msra.mxu0 %v1772
        %1806 = vmatprep.subr.mxu0 0.0
        %1807 = vmatpush1.msra.mxu0 %v1773
        %1808 = vmatprep.subr.mxu0 0.0
        %1809 = vmatpush1.msra.mxu0 %v1774
        %1810 = vmatprep.subr.mxu0 0.0
        %1811 = vmatpush1.msra.mxu0 %v1775
        %1812 = vmatprep.subr.mxu0 0.0
        %1813 = vmatpush1.msra.mxu0 %v1776
        %1814 = vmatprep.subr.mxu0 0.0
        %1815 = vmatpush1.msra.mxu0 %v1777
        %1816 = vmatprep.subr.mxu0 0.0
        %1817 = vmatpush1.msra.mxu0 %v1778
        %1818 = vmatprep.subr.mxu0 0.0
        %1819 = vmatpush1.msra.mxu0 0.0
        %1820 = vmatprep.subr.mxu0 0.0
        %1821 = vmatpush1.msra.mxu0 0.0
        %1822 = vmatprep.subr.mxu0 0.0
        %1823 = vmatpush1.msra.mxu0 0.0
        %1824 = vmatprep.subr.mxu0 0.0
        %1825 = vmatpush1.msra.mxu0 0.0
        %1826 = vmatprep.subr.mxu0 0.0
        %1827 = vmatpush1.msra.mxu0 0.0
        %1828 = vmatprep.subr.mxu0 0.0
        %1829 = vmatpush1.msra.mxu0 0.0
        %1830 = vmatprep.subr.mxu0 0.0
        %1831 = vmatpush1.msra.mxu0 0.0
        %1832 = vmatprep.subr.mxu0 0.0
        %1833 = vmatpush1.msra.mxu0 0.0
        %1834 = vmatprep.subr.mxu0 0.0
        %1835 = vmatpush1.msra.mxu0 0.0
        %1836 = vmatprep.subr.mxu0 0.0
        %1837 = vmatpush1.msra.mxu0 0.0
        %1838 = vmatprep.subr.mxu0 0.0
        %1839 = vmatpush1.msra.mxu0 0.0
        %1840 = vmatprep.subr.mxu0 0.0
        %1841 = vmatpush1.msra.mxu0 0.0
        %1842 = vmatprep.subr.mxu0 0.0
        %1843 = vmatpush1.msra.mxu0 0.0
        %1844 = vmatprep.subr.mxu0 0.0
        %1845 = vmatpush1.msra.mxu0 0.0
        %1846 = vmatprep.subr.mxu0 0.0
        %1847 = vmatpush1.msra.mxu0 0.0
        %1848 = vmatprep.subr.mxu0 0.0
        %1849 = vmatpush1.msra.mxu0 0.0
        %1850 = vmatprep.mubr.f32.mxu0 0.0
        %1851 = vmatmul.mubr.f32.gmra.mrb[0].mxu0 %v1700
        %v1852 = vpop.f32.mrb[0].mxu0
        %v1853 = vadd.f32 %v1784, %v1852
        %v1854 = vpop.f32.mrb[0].mxu0
        %1855 = vmatprep.mubr.f32.mxu0 0.0
        %1856 = vmatmul.mubr.f32.gmra.mrb[0].mxu0 %v1702
        %v1857 = vpop.f32.mrb[0].mxu0
        %v1858 = vadd.f32 %v1784, %v1857
        %v1859 = vpop.f32.mrb[0].mxu0
        %1860 = vmatprep.mubr.f32.mxu0 0.0
        %1861 = vmatmul.mubr.f32.gmra.mrb[0].mxu0 %v1704
        %v1862 = vpop.f32.mrb[0].mxu0
        %v1863 = vadd.f32 %v1784, %v1862
        %v1864 = vpop.f32.mrb[0].mxu0
        %1865 = vmatprep.mubr.f32.mxu0 0.0
        %1866 = vmatmul.mubr.f32.gmra.mrb[0].mxu0 %v1706
        %v1867 = vpop.f32.mrb[0].mxu0
        %v1868 = vadd.f32 %v1784, %v1867
        %v1869 = vpop.f32.mrb[0].mxu0
        %1870 = vmatprep.mubr.f32.mxu0 0.0
        %1871 = vmatmul.mubr.f32.gmra.mrb[0].mxu0 %v1708
        %v1872 = vpop.f32.mrb[0].mxu0
        %v1873 = vadd.f32 %v1784, %v1872
        %v1874 = vpop.f32.mrb[0].mxu0
        %1875 = vmatprep.mubr.f32.mxu0 0.0
        %1876 = vmatmul.mubr.f32.gmra.mrb[0].mxu0 %v1710
        %v1877 = vpop.f32.mrb[0].mxu0
        %v1878 = vadd.f32 %v1784, %v1877
        %v1879 = vpop.f32.mrb[0].mxu0
        %1880 = vmatprep.mubr.f32.mxu0 0.0
        %1881 = vmatmul.mubr.f32.gmra.mrb[0].mxu0 %v1712
        %v1882 = vpop.f32.mrb[0].mxu0
        %v1883 = vadd.f32 %v1784, %v1882
        %v1884 = vpop.f32.mrb[0].mxu0
        %1885 = vmatprep.mubr.f32.mxu0 0.0
        %1886 = vmatmul.mubr.f32.gmra.mrb[0].mxu0 %v1714
        %v1887 = vpop.f32.mrb[0].mxu0
        %v1888 = vadd.f32 %v1784, %v1887
        %v1889 = vpop.f32.mrb[0].mxu0
        %1890 = vmatprep.mubr.f32.mxu0 0.0
        %1891 = vmatmul.mubr.f32.gmra.mrb[0].mxu0 %v1716
        %v1892 = vpop.f32.mrb[0].mxu0
        %v1893 = vadd.f32 %v1784, %v1892
        %v1894 = vpop.f32.mrb[0].mxu0
        %1895 = vmatprep.mubr.f32.mxu0 0.0
        %1896 = vmatmul.mubr.f32.gmra.mrb[0].mxu0 %v1718
        %v1897 = vpop.f32.mrb[0].mxu0
        %v1898 = vadd.f32 %v1784, %v1897
        %v1899 = vpop.f32.mrb[0].mxu0
        %1900 = vmatprep.mubr.f32.mxu0 0.0
        %1901 = vmatmul.mubr.f32.gmra.mrb[0].mxu0 %v1720
        %v1902 = vpop.f32.mrb[0].mxu0
        %v1903 = vadd.f32 %v1784, %v1902
        %v1904 = vpop.f32.mrb[0].mxu0
        %1905 = vmatprep.mubr.f32.mxu0 0.0
        %1906 = vmatmul.mubr.f32.gmra.mrb[0].mxu0 %v1722
        %v1907 = vpop.f32.mrb[0].mxu0
        %v1908 = vadd.f32 %v1784, %v1907
        %v1909 = vpop.f32.mrb[0].mxu0
        %1910 = vmatprep.mubr.f32.mxu0 0.0
        %1911 = vmatmul.mubr.f32.gmra.mrb[0].mxu0 %v1724
        %v1912 = vpop.f32.mrb[0].mxu0
        %v1913 = vadd.f32 %v1784, %v1912
        %v1914 = vpop.f32.mrb[0].mxu0
        %1915 = vmatprep.mubr.f32.mxu0 0.0
        %1916 = vmatmul.mubr.f32.gmra.mrb[0].mxu0 %v1726
        %v1917 = vpop.f32.mrb[0].mxu0
        %v1918 = vadd.f32 %v1784, %v1917
        %v1919 = vpop.f32.mrb[0].mxu0
        %1920 = vmatprep.mubr.f32.mxu0 0.0
        %1921 = vmatmul.mubr.f32.gmra.mrb[0].mxu0 %v1728
        %v1922 = vpop.f32.mrb[0].mxu0
        %v1923 = vadd.f32 %v1784, %v1922
        %v1924 = vpop.f32.mrb[0].mxu0
        %1925 = vmatprep.mubr.f32.mxu0 0.0
        %1926 = vmatmul.mubr.f32.gmra.mrb[0].mxu0 %v1730
        %v1927 = vpop.f32.mrb[0].mxu0
        %v1928 = vadd.f32 %v1784, %v1927
        %v1929 = vpop.f32.mrb[0].mxu0
        %1930 = vmatprep.mubr.f32.mxu0 0.0
        %1931 = vmatmul.mubr.f32.gmra.mrb[0].mxu0 %v1732
        %v1932 = vpop.f32.mrb[0].mxu0
        %v1933 = vadd.f32 %v1784, %v1932
        %v1934 = vpop.f32.mrb[0].mxu0
        %1935 = vmatprep.mubr.f32.mxu0 0.0
        %1936 = vmatmul.mubr.f32.gmra.mrb[0].mxu0 %v1734
        %v1937 = vpop.f32.mrb[0].mxu0
        %v1938 = vadd.f32 %v1784, %v1937
        %v1939 = vpop.f32.mrb[0].mxu0
        %1940 = vmatprep.mubr.f32.mxu0 0.0
        %1941 = vmatmul.mubr.f32.gmra.mrb[0].mxu0 %v1736
        %v1942 = vpop.f32.mrb[0].mxu0
        %v1943 = vadd.f32 %v1784, %v1942
        %v1944 = vpop.f32.mrb[0].mxu0
        %1945 = vmatprep.mubr.f32.mxu0 0.0
        %1946 = vmatmul.mubr.f32.gmra.mrb[0].mxu0 %v1738
        %v1947 = vpop.f32.mrb[0].mxu0
        %v1948 = vadd.f32 %v1784, %v1947
        %v1949 = vpop.f32.mrb[0].mxu0
        %1950 = vmatprep.mubr.f32.mxu0 0.0
        %1951 = vmatmul.mubr.f32.gmra.mrb[0].mxu0 %v1740
        %v1952 = vpop.f32.mrb[0].mxu0
        %v1953 = vadd.f32 %v1784, %v1952
        %v1954 = vpop.f32.mrb[0].mxu0
        %1955 = vmatprep.mubr.f32.mxu0 0.0
        %1956 = vmatmul.mubr.f32.gmra.mrb[0].mxu0 %v1742
        %v1957 = vpop.f32.mrb[0].mxu0
        %v1958 = vadd.f32 %v1784, %v1957
        %v1959 = vpop.f32.mrb[0].mxu0
        %1960 = vmatprep.mubr.f32.mxu0 0.0
        %1961 = vmatmul.mubr.f32.gmra.mrb[0].mxu0 %v1744
        %v1962 = vpop.f32.mrb[0].mxu0
        %v1963 = vadd.f32 %v1784, %v1962
        %v1964 = vpop.f32.mrb[0].mxu0
        %1965 = vmatprep.mubr.f32.mxu0 0.0
        %1966 = vmatmul.mubr.f32.gmra.mrb[0].mxu0 %v1746
        %v1967 = vpop.f32.mrb[0].mxu0
        %v1968 = vadd.f32 %v1784, %v1967
        %v1969 = vpop.f32.mrb[0].mxu0
        %1970 = vmatprep.mubr.f32.mxu0 0.0
        %1971 = vmatmul.mubr.f32.gmra.mrb[0].mxu0 %v1748
        %v1972 = vpop.f32.mrb[0].mxu0
        %v1973 = vadd.f32 %v1784, %v1972
        %v1974 = vpop.f32.mrb[0].mxu0
        %1975 = vmatprep.mubr.f32.mxu0 0.0
        %1976 = vmatmul.mubr.f32.gmra.mrb[0].mxu0 %v1750
        %v1977 = vpop.f32.mrb[0].mxu0
        %v1978 = vadd.f32 %v1784, %v1977
        %v1979 = vpop.f32.mrb[0].mxu0
        %1980 = vmatprep.mubr.f32.mxu0 0.0
        %1981 = vmatmul.mubr.f32.gmra.mrb[0].mxu0 %v1752
        %v1982 = vpop.f32.mrb[0].mxu0
        %v1983 = vadd.f32 %v1784, %v1982
        %v1984 = vpop.f32.mrb[0].mxu0
        %1985 = vmatprep.mubr.f32.mxu0 0.0
        %1986 = vmatmul.mubr.f32.gmra.mrb[0].mxu0 %v1754
        %v1987 = vpop.f32.mrb[0].mxu0
        %v1988 = vadd.f32 %v1784, %v1987
        %v1989 = vpop.f32.mrb[0].mxu0
        %1990 = vmatprep.mubr.f32.mxu0 0.0
        %1991 = vmatmul.mubr.f32.gmra.mrb[0].mxu0 %v1756
        %v1992 = vpop.f32.mrb[0].mxu0
        %v1993 = vadd.f32 %v1784, %v1992
        %v1994 = vpop.f32.mrb[0].mxu0
        %1995 = vmatprep.mubr.f32.mxu0 0.0
        %1996 = vmatmul.mubr.f32.gmra.mrb[0].mxu0 %v1758
        %v1997 = vpop.f32.mrb[0].mxu0
        %v1998 = vadd.f32 %v1784, %v1997
        %v1999 = vpop.f32.mrb[0].mxu0
        %2000 = vmatprep.mubr.f32.mxu0 0.0
        %2001 = vmatmul.mubr.f32.gmra.mrb[0].mxu0 %v1760
        %v2002 = vpop.f32.mrb[0].mxu0
        %v2003 = vadd.f32 %v1784, %v2002
        %v2004 = vpop.f32.mrb[0].mxu0
        %2005 = vmatprep.mubr.f32.mxu0 0.0
        %2006 = vmatmul.mubr.f32.gmra.mrb[0].mxu0 %v1762
        %v2007 = vpop.f32.mrb[0].mxu0
        %v2008 = vadd.f32 %v1784, %v2007
        %v2009 = vpop.f32.mrb[0].mxu0
        %2010 = vdwg.mxu0
        %2011 = vst [vmem:[%s408] sm:$0xff] %v1853
        %2012 = vst [vmem:[%s408 + $0x8] sm:$0xff] %v1858
        %2013 = vst [vmem:[%s408 + $0x10] sm:$0xff] %v1863
        %2014 = vst [vmem:[%s408 + $0x18] sm:$0xff] %v1868
        %2015 = vst [vmem:[%s408 + $0x20] sm:$0xff] %v1873
        %2016 = vst [vmem:[%s408 + $0x28] sm:$0xff] %v1878
        %2017 = vst [vmem:[%s408 + $0x30] sm:$0xff] %v1883
        %2018 = vst [vmem:[%s408 + $0x38] sm:$0xff] %v1888
        %2019 = vst [vmem:[%s408 + $0x40] sm:$0xff] %v1893
        %2020 = vst [vmem:[%s408 + $0x48] sm:$0xff] %v1898
        %2021 = vst [vmem:[%s408 + $0x50] sm:$0xff] %v1903
        %2022 = vst [vmem:[%s408 + $0x58] sm:$0xff] %v1908
        %2023 = vst [vmem:[%s408 + $0x60] sm:$0xff] %v1913
        %2024 = vst [vmem:[%s408 + $0x68] sm:$0xff] %v1918
        %2025 = vst [vmem:[%s408 + $0x70] sm:$0xff] %v1923
        %2026 = vst [vmem:[%s408 + $0x78] sm:$0xff] %v1928
        %2027 = vst [vmem:[%s408 + $0x80] sm:$0xff] %v1933
        %2028 = vst [vmem:[%s408 + $0x88] sm:$0xff] %v1938
        %2029 = vst [vmem:[%s408 + $0x90] sm:$0xff] %v1943
        %2030 = vst [vmem:[%s408 + $0x98] sm:$0xff] %v1948
        %2031 = vst [vmem:[%s408 + $0xa0] sm:$0xff] %v1953
        %2032 = vst [vmem:[%s408 + $0xa8] sm:$0xff] %v1958
        %2033 = vst [vmem:[%s408 + $0xb0] sm:$0xff] %v1963
        %2034 = vst [vmem:[%s408 + $0xb8] sm:$0xff] %v1968
        %2035 = vst [vmem:[%s408 + $0xc0] sm:$0xff] %v1973
        %2036 = vst [vmem:[%s408 + $0xc8] sm:$0xff] %v1978
        %2037 = vst [vmem:[%s408 + $0xd0] sm:$0xff] %v1983
        %2038 = vst [vmem:[%s408 + $0xd8] sm:$0xff] %v1988
        %2039 = vst [vmem:[%s408 + $0xe0] sm:$0xff] %v1993
        %2040 = vst [vmem:[%s408 + $0xe8] sm:$0xff] %v1998
        %2041 = vst [vmem:[%s408 + $0xf0] sm:$0xff] %v2003
        %2042 = vst [vmem:[%s408 + $0xf8] sm:$0xff] %v2008
        %s2043 = sand.u32 %s230, 1
        %s2044 = scalar_lea.sflag [#allocation4], %s2043
        %s2045 = sand.u32 %s230, 1
        %s2046 = smul.addr %s2045, 256
        %s2047 = scalar_lea.vmem [#allocation11], %s2046
        // Predicated region
        $region77: #{sae_forward.1} parent=55 // pred_check
          %p2048 = pneg %p240
        $region78: #{sae_forward.1} parent=55 // pred_check_branch
          %2050 = sbr.rel (%p2048) target = $region80
        $region79: #{sae_forward.1} parent=55 // pred_region
          %s2051 = smul.u32 32, %s28
          %s2053 = ssub.s32 4096, 4096
          %2054 = vsyncadd %s2044, %s2053
          %s2055 = smul.addr %s2051, 128
          %s2056 = scalar_lea.hbm %s9, %s2055
          %s2057 = sshll.u32 %s2047, 4
          %s2058 = int_to_ptr.vmem [resolvable:$true] %s2057
          %2063 = dma.vmem_to_hbm [thread:$0]  %s2058, 4096, %s2056, %s2044, 128, 128, 8
        $region80: #{sae_forward.1} parent=55 // pred_fallthru
          _
      $region56: #{sae_forward.1} parent=5 // pred_fallthru
        _
      %p2064 = scmp.le.s32.totalorder 2, %s23
      // Predicated region
      $region81: #{sae_forward.1} parent=5 // pred_check
        %p2065 = pneg %p2064
      $region82: #{sae_forward.1} parent=5 // pred_check_branch
        %2067 = sbr.rel (%p2065) target = $region84
      $region83: #{sae_forward.1} parent=5 // pred_region
        %s2068 = ssub.s32 %s23, 2
        // Predicated region
        $region85: #{sae_forward.1} parent=83 // pred_check
          %p2069 = pneg %p246
        $region86: #{sae_forward.1} parent=83 // pred_check_branch
          %2071 = sbr.rel (%p2069) target = $region88
        $region87: #{sae_forward.1} parent=83 // pred_region
          %s2072 = sand.u32 %s231, 1
          %s2073 = scalar_lea.sflag [#allocation4], %s2072
          %s2074 = sand.u32 %s231, 1
          %s2075 = smul.addr %s2074, 256
          %s2076 = scalar_lea.vmem [#allocation11], %s2075
          %2077 = dma.done %s2073, 4096
        $region88: #{sae_forward.1} parent=83 // pred_fallthru
          _
      $region84: #{sae_forward.1} parent=5 // pred_fallthru
        _
    $region6: #{sae_forward.1} parent=1 // loop_footer
      %s27 = sadd.s32 1, %s23
    $region7: #{sae_forward.1} parent=1 // loop_footer_branch
      %22 = sbr.rel target = $region3
    $region8: #{sae_forward.1} parent=1 // loop_exit
      _
    %2078 = vsyncpa [#allocation3], 1
    %s2079 = scalar_lea.sflag [#allocation3], 1
    %2080 = vsyncpa %s2079, 1
    %2081 = vsyncpa [#allocation6], 1
    %2082 = vsyncpa [#allocation9], 1
    %2083 = vsyncpa [#allocation4], 1
    %s2084 = scalar_lea.sflag [#allocation4], 1
    %2085 = vsyncpa %s2084, 1

</llo_original>
